<compile_context>
chip_gen: v7x
topology: tpu7x:2x2x1
jax: 0.10.0
libtpu: 0.0.40
codegen_flags: <defaults>
</compile_context>

<pallas_src>
import functools

import numpy as np
import jax
import jax.numpy as jnp
from jax import lax
from jax.experimental import pallas as pl
from jax.experimental.pallas import tpu as pltpu


def _pos_embed_kernel(x_ref, w_ref, pcos_ref, psin_ref, out_ref, *, d):
    """x_ref: (TB, D); w_ref: (D, D*F); pcos/psin_ref: (D*F, OUT); out_ref: (TB, OUT)."""
    xb = x_ref[...]                                                  # (TB, D)

    # prod[b, d*F + f] = x[b, d] * 2**f  (exact: one power-of-two per column, rest 0)
    prod = jnp.dot(xb, w_ref[...],
                   precision=lax.Precision.HIGHEST,
                   preferred_element_type=jnp.float32)               # (TB, D*F)

    # Scatter cos/sin slabs to their final column offsets via 0/1 placement matrices
    # on the MXU, so the write below is one full-width lane-dense store.
    placed = jnp.dot(jnp.cos(prod), pcos_ref[...],
                     precision=lax.Precision.HIGHEST,
                     preferred_element_type=jnp.float32)             # (TB, OUT)
    placed = placed + jnp.dot(jnp.sin(prod), psin_ref[...],
                              precision=lax.Precision.HIGHEST,
                              preferred_element_type=jnp.float32)

    out_ref[...] = placed                # columns [0, d) are exactly zero here
    out_ref[:, 0:d] = xb                 # overwrite passthrough section (offset-0 store)


def pos_embedder(x, n_freq, *, block_b=1024):
    """x: (B, D) float32 -> (B, D + 2*D*n_freq) float32 (matches PyTorch PosEmbedder)."""
    B, D = x.shape
    F = int(n_freq)
    DF = D * F
    OUT = D + 2 * DF

    # Tiny constant operands (exact powers of two / 0-1 entries), built host-side.
    mul = (2.0 ** np.arange(F)).astype(np.float32)                   # (F,) exact
    w = np.zeros((D, DF), np.float32)
    for di in range(D):
        w[di, di * F:(di + 1) * F] = mul                             # W[d, d*F+f] = 2**f
    pcos = np.zeros((DF, OUT), np.float32)
    pcos[np.arange(DF), D + np.arange(DF)] = 1.0
    psin = np.zeros((DF, OUT), np.float32)
    psin[np.arange(DF), D + DF + np.arange(DF)] = 1.0

    # Batch tile: multiple of 8 (sublane) unless a single block covers the whole batch.
    if B <= block_b:
        tb = B
    else:
        tb = max(8, (block_b // 8) * 8)
    grid = (pl.cdiv(B, tb),)

    kernel = functools.partial(_pos_embed_kernel, d=D)

    return pl.pallas_call(
        kernel,
        out_shape=jax.ShapeDtypeStruct((B, OUT), x.dtype),
        grid=grid,
        in_specs=[
            pl.BlockSpec((tb, D), lambda i: (i, 0)),      # x: tiled over batch
            pl.BlockSpec((D, DF), lambda i: (0, 0)),      # grid-invariant constants
            pl.BlockSpec((DF, OUT), lambda i: (0, 0)),
            pl.BlockSpec((DF, OUT), lambda i: (0, 0)),
        ],
        out_specs=pl.BlockSpec((tb, OUT), lambda i: (i, 0)),   # fused output slab
        compiler_params=pltpu.CompilerParams(
            dimension_semantics=("parallel",),            # lets v7x split batch over 2 TCs
            vmem_limit_bytes=32 * 1024 * 1024,            # safe on v5e/v6e/v7x
        ),
    )(x, jnp.asarray(w), jnp.asarray(pcos), jnp.asarray(psin))


def pos_embedder_ref(x, n_freq):
    """Pure-JAX reference mirroring the PyTorch forward."""
    B = x.shape[0]
    mul = jnp.asarray((2.0 ** np.arange(n_freq)).astype(np.float32))
    prod = x[:, :, None] * mul[None, None, :]
    return jnp.concatenate(
        [x, jnp.cos(prod).reshape(B, -1), jnp.sin(prod).reshape(B, -1)], axis=-1
    )


if __name__ == "__main__":
    key = jax.random.PRNGKey(0)
    B, D, n_freq = 16, 4, 8
    x = jax.random.uniform(key, (B, D), dtype=jnp.float32, minval=-1.0, maxval=1.0)

    # block_b=8 -> tb=8, grid=(2,): exercises the pipelined, batch-tiled path.
    out = pos_embedder(x, n_freq, block_b=8)
    out = jax.block_until_ready(out)

    ref = pos_embedder_ref(x, n_freq)
    assert out.shape == (B, D + 2 * D * n_freq), out.shape
    err = float(jnp.max(jnp.abs(out - ref)))
    assert err < 1e-4, f"mismatch vs reference: max abs err {err}"

    print("KERNEL_OK")
</pallas_src>

<mosaic_0001>
module attributes {stable_mosaic.version = 11 : i64} {
  func.func @_pos_embed_kernel(%arg0: i32, %arg1: memref<8x4xf32, #tpu.memory_space<vmem>>, %arg2: memref<4x32xf32, #tpu.memory_space<vmem>>, %arg3: memref<32x68xf32, #tpu.memory_space<vmem>>, %arg4: memref<32x68xf32, #tpu.memory_space<vmem>>, %arg5: memref<8x68xf32, #tpu.memory_space<vmem>>) attributes {dimension_semantics = [#tpu.dimension_semantics<parallel>], iteration_bounds = array<i64: 2>, scalar_prefetch = 0 : i64, scratch_operands = 0 : i64, tpu.core_type = #tpu.core_type<tc>, window_params = [{transform_indices = @transform_0, window_bounds = array<i64: 8, 4>}, {pipeline_mode = #tpu.pipeline_mode<synchronous>, transform_indices = @transform_1, window_bounds = array<i64: 4, 32>}, {pipeline_mode = #tpu.pipeline_mode<synchronous>, transform_indices = @transform_2, window_bounds = array<i64: 32, 68>}, {pipeline_mode = #tpu.pipeline_mode<synchronous>, transform_indices = @transform_3, window_bounds = array<i64: 32, 68>}, {transform_indices = @transform_4, window_bounds = array<i64: 8, 68>}]} {
    %c0 = arith.constant 0 : index
    %c0_0 = arith.constant 0 : index
    %0 = vector.load %arg1[%c0, %c0_0] : memref<8x4xf32, #tpu.memory_space<vmem>>, vector<8x4xf32>
    %c0_1 = arith.constant 0 : index
    %c0_2 = arith.constant 0 : index
    %1 = vector.load %arg2[%c0_1, %c0_2] : memref<4x32xf32, #tpu.memory_space<vmem>>, vector<4x32xf32>
    %cst = arith.constant dense<0.000000e+00> : vector<8x32xf32>
    %2 = tpu.matmul %0, %1, %cst {dimension_numbers = #tpu.dot_dimension_numbers<[1], [0], [0], [1], [0, 0, 1, 1], [], []>, precision = #tpu.contract_precision<fp32>} : vector<8x4xf32>, vector<4x32xf32>, vector<8x32xf32> -> vector<8x32xf32>
    %3 = math.cos %2 : vector<8x32xf32>
    %c0_3 = arith.constant 0 : index
    %c0_4 = arith.constant 0 : index
    %4 = vector.load %arg3[%c0_3, %c0_4] : memref<32x68xf32, #tpu.memory_space<vmem>>, vector<32x68xf32>
    %cst_5 = arith.constant dense<0.000000e+00> : vector<8x68xf32>
    %5 = tpu.matmul %3, %4, %cst_5 {dimension_numbers = #tpu.dot_dimension_numbers<[1], [0], [0], [1], [0, 0, 1, 1], [], []>, precision = #tpu.contract_precision<fp32>} : vector<8x32xf32>, vector<32x68xf32>, vector<8x68xf32> -> vector<8x68xf32>
    %6 = math.sin %2 : vector<8x32xf32>
    %c0_6 = arith.constant 0 : index
    %c0_7 = arith.constant 0 : index
    %7 = vector.load %arg4[%c0_6, %c0_7] : memref<32x68xf32, #tpu.memory_space<vmem>>, vector<32x68xf32>
    %cst_8 = arith.constant dense<0.000000e+00> : vector<8x68xf32>
    %8 = tpu.matmul %6, %7, %cst_8 {dimension_numbers = #tpu.dot_dimension_numbers<[1], [0], [0], [1], [0, 0, 1, 1], [], []>, precision = #tpu.contract_precision<fp32>} : vector<8x32xf32>, vector<32x68xf32>, vector<8x68xf32> -> vector<8x68xf32>
    %9 = arith.addf %5, %8 : vector<8x68xf32>
    %c0_9 = arith.constant 0 : index
    %c0_10 = arith.constant 0 : index
    %10 = vector.load %arg5[%c0_9, %c0_10] : memref<8x68xf32, #tpu.memory_space<vmem>>, vector<8x68xf32>
    tpu.vector_store %arg5[%c0_9, %c0_10], %9 {strides = array<i32>} : memref<8x68xf32, #tpu.memory_space<vmem>>, vector<8x68xf32>,
    %c0_11 = arith.constant 0 : index
    %c0_12 = arith.constant 0 : index
    %11 = vector.load %arg5[%c0_11, %c0_12] : memref<8x68xf32, #tpu.memory_space<vmem>>, vector<8x4xf32>
    tpu.vector_store %arg5[%c0_11, %c0_12], %0 {strides = array<i32>} : memref<8x68xf32, #tpu.memory_space<vmem>>, vector<8x4xf32>,
    return
  }
  func.func @transform_0(%arg0: i32) -> (i32, i32) {
    %c0_i32 = arith.constant 0 : i32
    %c0_i32_0 = arith.constant 0 : i32
    return %arg0, %c0_i32 : i32, i32
  }
  func.func @transform_1(%arg0: i32) -> (i32, i32) {
    %c0_i32 = arith.constant 0 : i32
    %c0_i32_0 = arith.constant 0 : i32
    %c0_i32_1 = arith.constant 0 : i32
    return %c0_i32, %c0_i32_0 : i32, i32
  }
  func.func @transform_2(%arg0: i32) -> (i32, i32) {
    %c0_i32 = arith.constant 0 : i32
    %c0_i32_0 = arith.constant 0 : i32
    %c0_i32_1 = arith.constant 0 : i32
    return %c0_i32, %c0_i32_0 : i32, i32
  }
  func.func @transform_3(%arg0: i32) -> (i32, i32) {
    %c0_i32 = arith.constant 0 : i32
    %c0_i32_0 = arith.constant 0 : i32
    %c0_i32_1 = arith.constant 0 : i32
    return %c0_i32, %c0_i32_0 : i32, i32
  }
  func.func @transform_4(%arg0: i32) -> (i32, i32) {
    %c0_i32 = arith.constant 0 : i32
    %c0_i32_0 = arith.constant 0 : i32
    return %arg0, %c0_i32 : i32, i32
  }
}

</mosaic_0001>

<llo_original>
// kernel: tpu_custom_call.1
$region0: #{tpu_custom_call.1}
  #allocation0 [shape = 'u32[]', space=smem, size = 0x4, offset = 0x4, fixed_abs, tag = 'smem constant byte address 0x4 - core index']
  #allocation1 [shape = 'u32[144,128]{1,0:T(1,128)}', space=vmem, size = 0x12000, scoped, tag = 'internal scratch']
  %s0 = inlined_call_operand.vmem [shape: f32[16,4], index: 0, kind: input, shape index: {}]
  %s1 = inlined_call_operand.vmem [shape: f32[4,32], index: 1, kind: input, shape index: {}]
  %s2 = inlined_call_operand.hbm [shape: f32[32,68], index: 2, kind: input, shape index: {}]
  %s3 = inlined_call_operand.hbm [shape: f32[32,68], index: 3, kind: input, shape index: {}]
  %s4 = inlined_call_operand.hbm [shape: f32[16,68], index: 4, kind: output, shape index: {}]
  %s5 = sld [smem:[#allocation0]]
  $region57: #{tpu_custom_call.1} parent=0
    _
  %s7 = ssub.s32 1, %s5
  %s8 = scalar_select 0, %s7, %s5
  $region1: #{tpu_custom_call.1} parent=0
    #allocation2 [shape = 'u8[16384]{0}', space=vmem, size = 0x4000, scoped, tag = 'input window, operand 2, single buffered']
    #allocation3 [shape = 's32[2]{0}', space=sflag, size = 0x8, scoped, tag = 'scoped memory for tpu_custom_call.1']
    #allocation4 [shape = 's32[2]{0}', space=sflag, size = 0x8, scoped, tag = 'scoped memory for tpu_custom_call.1']
    #allocation5 [shape = 'u8[16384]{0}', space=vmem, size = 0x4000, scoped, tag = 'input window, operand 3, single buffered']
    #allocation6 [shape = 's32[1]{0}', space=sflag, size = 0x4, scoped, tag = 'scoped memory for tpu_custom_call.1']
    #allocation7 [shape = 'u8[8192]{0}', space=vmem, size = 0x2000, scoped, tag = 'output window, operand 0']
    %9 = vsyncpa [#allocation3], 0
    %10 = vsyncpa [#allocation6], 0
    %11 = vsyncpa [#allocation4], 0
    %s12 = scalar_lea.sflag [#allocation4], 1
    %13 = vsyncpa %s12, 0
    loop: start=0, step=1, limit=4
    $region2: #{tpu_custom_call.1} parent=1 // loop_pre_header
      _
    $region3: #{tpu_custom_call.1} parent=1 // loop_header
      %s15 = sphi 0, %s19
      %p16 = scmp.ge.s32.totalorder %s15, 4
      %s25 = sphi 0, %s27
      %s28 = sphi 0, %s25
      %s29 = sphi 0, %s28
      %s45 = sphi 0, %s29
      %s49 = sphi 0, %s49
      %s51 = sphi 0, %s49
      %s52 = sphi 0, %s51
      %s66 = sphi 0, %s52
      %s70 = sphi 0, %s70
      %s72 = sphi 0, %s70
      %s73 = sphi 0, %s72
      %s87 = sphi 0, %s73
      %s91 = sphi 0, %s91
      %s93 = sphi 0, %s91
      %s94 = sphi 0, %s93
      %s108 = sphi 0, %s94
      %s114 = sphi 0, %s116
      %s117 = sphi 0, %s114
      %s118 = sphi 0, %s117
      %s134 = sphi 0, %s118
    $region4: #{tpu_custom_call.1} parent=1 // loop_header_branch
      %18 = sbr.rel (%p16) target = $region8
    $region5: #{tpu_custom_call.1} parent=1 // loop_body
      %s20 = ssub.s32 %s15, 1
      %s21 = ssub.s32 %s15, 2
      %s22 = sadd.s32 %s15, 1
      %s23 = ssub.s32 %s15, %s22
      %p24 = scmp.eq.s32.totalorder %s23, 0
      %s26 = sadd.s32 %s25, 1
      %s27 = scalar_select %p24, %s25, %s26
      %p30 = pneg %p24
      %p31 = scmp.eq.s32.totalorder %s15, 1
      %p32 = por %p30, %p31
      %p33 = scmp.ne.s32.totalorder %s25, %s28
      %p34 = scmp.eq.s32.totalorder %s15, 0
      %p35 = por %p33, %p34
      %p36 = scmp.ne.s32.totalorder %s25, %s28
      %p37 = scmp.eq.s32.totalorder %s20, 1
      %p38 = por %p36, %p37
      %p39 = scmp.ne.s32.totalorder %s28, %s29
      %p40 = scmp.eq.s32.totalorder %s20, 0
      %p41 = por %p39, %p40
      %p42 = scmp.ne.s32.totalorder %s28, %s29
      %p43 = scmp.eq.s32.totalorder %s21, 1
      %p44 = por %p42, %p43
      %p46 = scmp.ne.s32.totalorder %s29, %s45
      %p47 = scmp.eq.s32.totalorder %s21, 0
      %p48 = por %p46, %p47
      %s50 = sadd.s32 %s49, 1
      %p53 = scmp.eq.s32.totalorder %s15, 1
      %p54 = scmp.ne.s32.totalorder %s49, %s51
      %p55 = scmp.eq.s32.totalorder %s15, 0
      %p56 = por %p54, %p55
      %p57 = scmp.ne.s32.totalorder %s49, %s51
      %p58 = scmp.eq.s32.totalorder %s20, 1
      %p59 = por %p57, %p58
      %p60 = scmp.ne.s32.totalorder %s51, %s52
      %p61 = scmp.eq.s32.totalorder %s20, 0
      %p62 = por %p60, %p61
      %p63 = scmp.ne.s32.totalorder %s51, %s52
      %p64 = scmp.eq.s32.totalorder %s21, 1
      %p65 = por %p63, %p64
      %p67 = scmp.ne.s32.totalorder %s52, %s66
      %p68 = scmp.eq.s32.totalorder %s21, 0
      %p69 = por %p67, %p68
      %s71 = sadd.s32 %s70, 1
      %p74 = scmp.eq.s32.totalorder %s15, 1
      %p75 = scmp.ne.s32.totalorder %s70, %s72
      %p76 = scmp.eq.s32.totalorder %s15, 0
      %p77 = por %p75, %p76
      %p78 = scmp.ne.s32.totalorder %s70, %s72
      %p79 = scmp.eq.s32.totalorder %s20, 1
      %p80 = por %p78, %p79
      %p81 = scmp.ne.s32.totalorder %s72, %s73
      %p82 = scmp.eq.s32.totalorder %s20, 0
      %p83 = por %p81, %p82
      %p84 = scmp.ne.s32.totalorder %s72, %s73
      %p85 = scmp.eq.s32.totalorder %s21, 1
      %p86 = por %p84, %p85
      %p88 = scmp.ne.s32.totalorder %s73, %s87
      %p89 = scmp.eq.s32.totalorder %s21, 0
      %p90 = por %p88, %p89
      %s92 = sadd.s32 %s91, 1
      %p95 = scmp.eq.s32.totalorder %s15, 1
      %p96 = scmp.ne.s32.totalorder %s91, %s93
      %p97 = scmp.eq.s32.totalorder %s15, 0
      %p98 = por %p96, %p97
      %p99 = scmp.ne.s32.totalorder %s91, %s93
      %p100 = scmp.eq.s32.totalorder %s20, 1
      %p101 = por %p99, %p100
      %p102 = scmp.ne.s32.totalorder %s93, %s94
      %p103 = scmp.eq.s32.totalorder %s20, 0
      %p104 = por %p102, %p103
      %p105 = scmp.ne.s32.totalorder %s93, %s94
      %p106 = scmp.eq.s32.totalorder %s21, 1
      %p107 = por %p105, %p106
      %p109 = scmp.ne.s32.totalorder %s94, %s108
      %p110 = scmp.eq.s32.totalorder %s21, 0
      %p111 = por %p109, %p110
      %s112 = ssub.s32 %s15, %s22
      %p113 = scmp.eq.s32.totalorder %s112, 0
      %s115 = sadd.s32 %s114, 1
      %s116 = scalar_select %p113, %s114, %s115
      %p119 = pneg %p113
      %p120 = scmp.eq.s32.totalorder %s15, 1
      %p121 = por %p119, %p120
      %p122 = scmp.ne.s32.totalorder %s114, %s117
      %p123 = scmp.eq.s32.totalorder %s15, 0
      %p124 = por %p122, %p123
      %p125 = scmp.ne.s32.totalorder %s114, %s117
      %p126 = scmp.eq.s32.totalorder %s20, 1
      %p127 = por %p125, %p126
      %p128 = scmp.ne.s32.totalorder %s117, %s118
      %p129 = scmp.eq.s32.totalorder %s20, 0
      %p130 = por %p128, %p129
      %p131 = scmp.ne.s32.totalorder %s117, %s118
      %p132 = scmp.eq.s32.totalorder %s21, 1
      %p133 = por %p131, %p132
      %p135 = scmp.ne.s32.totalorder %s118, %s134
      %p136 = scmp.eq.s32.totalorder %s21, 0
      %p137 = por %p135, %p136
      %p138 = scmp.le.s32.totalorder 1, %s15
      %p139 = scmp.lt.s32.totalorder %s15, 3
      %p140 = pnand %p138, %p139
      %p141 = pneg %p140
      // Predicated region
      $region9: #{tpu_custom_call.1} parent=5 // pred_check
        _
      $region10: #{tpu_custom_call.1} parent=5 // pred_check_branch
        %143 = sbr.rel (%p140) target = $region12
      $region11: #{tpu_custom_call.1} parent=5 // pred_region
        %s144 = ssub.s32 %s15, 1
        // Predicated region
        $region13: #{tpu_custom_call.1} parent=11 // pred_check
          %p145 = pneg %p62
        $region14: #{tpu_custom_call.1} parent=11 // pred_check_branch
          %147 = sbr.rel (%p145) target = $region16
        $region15: #{tpu_custom_call.1} parent=11 // pred_region
          _
        $region16: #{tpu_custom_call.1} parent=11 // pred_fallthru
          _
        // Predicated region
        $region17: #{tpu_custom_call.1} parent=11 // pred_check
          %p148 = pneg %p83
        $region18: #{tpu_custom_call.1} parent=11 // pred_check_branch
          %150 = sbr.rel (%p148) target = $region20
        $region19: #{tpu_custom_call.1} parent=11 // pred_region
          %s152 = ssub.s32 512, 512
          %153 = vsyncadd [#allocation3], %s152
          %s154 = sshll.u32 [#allocation2], 4
          %s155 = int_to_ptr.vmem [resolvable:$true] %s154
          %160 = dma.hbm_to_vmem [thread:$0]  %s2, 512, %s155, [#allocation3], 128, 128, 8
        $region20: #{tpu_custom_call.1} parent=11 // pred_fallthru
          _
        // Predicated region
        $region21: #{tpu_custom_call.1} parent=11 // pred_check
          %p161 = pneg %p104
        $region22: #{tpu_custom_call.1} parent=11 // pred_check_branch
          %163 = sbr.rel (%p161) target = $region24
        $region23: #{tpu_custom_call.1} parent=11 // pred_region
          %s165 = ssub.s32 512, 512
          %166 = vsyncadd [#allocation6], %s165
          %s167 = sshll.u32 [#allocation5], 4
          %s168 = int_to_ptr.vmem [resolvable:$true] %s167
          %173 = dma.hbm_to_vmem [thread:$0]  %s3, 512, %s168, [#allocation6], 128, 128, 8
        $region24: #{tpu_custom_call.1} parent=11 // pred_fallthru
          _
      $region12: #{tpu_custom_call.1} parent=5 // pred_fallthru
        _
      %p174 = scmp.lt.s32.totalorder %s15, 2
      // Predicated region
      $region25: #{tpu_custom_call.1} parent=5 // pred_check
        %p175 = pneg %p174
      $region26: #{tpu_custom_call.1} parent=5 // pred_check_branch
        %177 = sbr.rel (%p175) target = $region28
      $region27: #{tpu_custom_call.1} parent=5 // pred_region
        // Predicated region
        $region29: #{tpu_custom_call.1} parent=27 // pred_check
          %p178 = pneg %p35
        $region30: #{tpu_custom_call.1} parent=27 // pred_check_branch
          %180 = sbr.rel (%p178) target = $region32
        $region31: #{tpu_custom_call.1} parent=27 // pred_region
          %p181 = scmp.lt.s32.totalorder %s15, 1
          %s182 = scalar_select %p181, %s15, 1
          %s183 = smul.addr %s182, 8
          %s184 = scalar_lea.vmem %s0, %s183
        $region32: #{tpu_custom_call.1} parent=27 // pred_fallthru
          _
      $region28: #{tpu_custom_call.1} parent=5 // pred_fallthru
        _
      %p185 = scmp.le.s32.totalorder 1, %s15
      %p186 = scmp.lt.s32.totalorder %s15, 3
      %p187 = pnand %p185, %p186
      %p188 = pneg %p187
      // Predicated region
      $region33: #{tpu_custom_call.1} parent=5 // pred_check
        _
      $region34: #{tpu_custom_call.1} parent=5 // pred_check_branch
        %190 = sbr.rel (%p187) target = $region36
      $region35: #{tpu_custom_call.1} parent=5 // pred_region
        %s191 = ssub.s32 %s15, 1
        // Predicated region
        $region37: #{tpu_custom_call.1} parent=35 // pred_check
          %p192 = pneg %p83
        $region38: #{tpu_custom_call.1} parent=35 // pred_check_branch
          %194 = sbr.rel (%p192) target = $region40
        $region39: #{tpu_custom_call.1} parent=35 // pred_region
          %195 = dma.done [#allocation3], 512
        $region40: #{tpu_custom_call.1} parent=35 // pred_fallthru
          _
        // Predicated region
        $region41: #{tpu_custom_call.1} parent=35 // pred_check
          %p196 = pneg %p104
        $region42: #{tpu_custom_call.1} parent=35 // pred_check_branch
          %198 = sbr.rel (%p196) target = $region44
        $region43: #{tpu_custom_call.1} parent=35 // pred_region
          %199 = dma.done [#allocation6], 512
        $region44: #{tpu_custom_call.1} parent=35 // pred_fallthru
          _
        %p200 = scmp.lt.s32.totalorder %s20, 1
        %s201 = scalar_select %p200, %s20, 1
        %s202 = smul.addr %s201, 8
        %s203 = scalar_lea.vmem %s0, %s202
        %p204 = pneg %p41
        %p205 = pneg %p38
        %p206 = pneg %p62
        %p207 = pneg %p59
        %p208 = pneg %p83
        %p209 = pneg %p80
        %p210 = pneg %p104
        %p211 = pneg %p101
        %p212 = pneg %p130
        %p213 = pneg %p127
        %s214 = sand.u32 %s117, 1
        %s215 = scalar_lea.sflag [#allocation4], %s214
        %s216 = sand.u32 %s117, 1
        %s217 = smul.addr %s216, 8
        %s218 = scalar_lea.vmem [#allocation7], %s217
        %p219 = scmp.lt.s32.totalorder %s20, 1
        %s220 = scalar_select %p219, %s20, 1
        %s221 = smul.addr %s220, 8
        %s222 = scalar_lea.vmem %s0, %s221
        %v223 = vld [vmem:[%s222] sm:$0xff]
        %v224 = vld [vmem:[%s1] sm:$0xf]
        %vm225 = vcmask 31744
        %v227 = vsel %vm225, %v223, 0
        %vm229 = vcmask 1043456
        %v231 = vsel %vm229, %v224, 0
        %233 = vmatprep.subr.mxu0 0.0
        %v234 = vand.u32 %v231, 4294901760
        %235 = vmatpush1.msra.mxu0 %v234
        %236 = vmatprep.subr.mxu0 0.0
        %237 = vmatpush1.msra.mxu0 0.0
        %238 = vmatprep.subr.mxu0 0.0
        %239 = vmatpush1.msra.mxu0 0.0
        %240 = vmatprep.subr.mxu0 0.0
        %241 = vmatpush1.msra.mxu0 0.0
        %242 = vmatprep.subr.mxu0 0.0
        %243 = vmatpush1.msra.mxu0 0.0
        %244 = vmatprep.subr.mxu0 0.0
        %245 = vmatpush1.msra.mxu0 0.0
        %246 = vmatprep.subr.mxu0 0.0
        %247 = vmatpush1.msra.mxu0 0.0
        %248 = vmatprep.subr.mxu0 0.0
        %249 = vmatpush1.msra.mxu0 0.0
        %250 = vmatprep.subr.mxu0 0.0
        %251 = vmatpush1.msra.mxu0 0.0
        %252 = vmatprep.subr.mxu0 0.0
        %253 = vmatpush1.msra.mxu0 0.0
        %254 = vmatprep.subr.mxu0 0.0
        %255 = vmatpush1.msra.mxu0 0.0
        %256 = vmatprep.subr.mxu0 0.0
        %257 = vmatpush1.msra.mxu0 0.0
        %258 = vmatprep.subr.mxu0 0.0
        %259 = vmatpush1.msra.mxu0 0.0
        %260 = vmatprep.subr.mxu0 0.0
        %261 = vmatpush1.msra.mxu0 0.0
        %262 = vmatprep.subr.mxu0 0.0
        %263 = vmatpush1.msra.mxu0 0.0
        %264 = vmatprep.subr.mxu0 0.0
        %265 = vmatpush1.msra.mxu0 0.0
        %266 = vmatprep.subr.mxu0 0.0
        %267 = vmatpush1.msra.mxu0 0.0
        %268 = vmatprep.subr.mxu0 0.0
        %269 = vmatpush1.msra.mxu0 0.0
        %270 = vmatprep.subr.mxu0 0.0
        %271 = vmatpush1.msra.mxu0 0.0
        %272 = vmatprep.subr.mxu0 0.0
        %273 = vmatpush1.msra.mxu0 0.0
        %274 = vmatprep.subr.mxu0 0.0
        %275 = vmatpush1.msra.mxu0 0.0
        %276 = vmatprep.subr.mxu0 0.0
        %277 = vmatpush1.msra.mxu0 0.0
        %278 = vmatprep.subr.mxu0 0.0
        %279 = vmatpush1.msra.mxu0 0.0
        %280 = vmatprep.subr.mxu0 0.0
        %281 = vmatpush1.msra.mxu0 0.0
        %282 = vmatprep.subr.mxu0 0.0
        %283 = vmatpush1.msra.mxu0 0.0
        %284 = vmatprep.subr.mxu0 0.0
        %285 = vmatpush1.msra.mxu0 0.0
        %286 = vmatprep.subr.mxu0 0.0
        %287 = vmatpush1.msra.mxu0 0.0
        %288 = vmatprep.subr.mxu0 0.0
        %289 = vmatpush1.msra.mxu0 0.0
        %290 = vmatprep.subr.mxu0 0.0
        %291 = vmatpush1.msra.mxu0 0.0
        %292 = vmatprep.subr.mxu0 0.0
        %293 = vmatpush1.msra.mxu0 0.0
        %294 = vmatprep.subr.mxu0 0.0
        %295 = vmatpush1.msra.mxu0 0.0
        %296 = vmatprep.subr.mxu0 0.0
        %297 = vmatpush1.msra.mxu0 0.0
        %298 = vmatprep.mubr.f32.mxu0 0.0
        %v299 = vand.u32 %v227, 4294901760
        %v300 = vsub.f32 %v227, %v299
        %v301 = vand.u32 %v300, 4294901760
        %v302 = vsub.f32 %v300, %v301
        %v303 = vand.u32 %v302, 4294901760
        %304 = vmatmul.mubr.f32.gmra.mrb[0].mxu0 %v303
        %v305 = vpop.f32.mrb[0].mxu0
        %v306 = vadd.f32 0.0, %v305
        %v307 = vpop.f32.mrb[0].mxu0
        %308 = vdwg.mxu0
        %309 = vmatprep.subr.mxu0 0.0
        %v310 = vand.u32 %v231, 4294901760
        %v311 = vsub.f32 %v231, %v310
        %v312 = vand.u32 %v311, 4294901760
        %v313 = vsub.f32 %v311, %v312
        %v314 = vand.u32 %v313, 4294901760
        %315 = vmatpush1.msra.mxu0 %v314
        %316 = vmatprep.subr.mxu0 0.0
        %317 = vmatpush1.msra.mxu0 0.0
        %318 = vmatprep.subr.mxu0 0.0
        %319 = vmatpush1.msra.mxu0 0.0
        %320 = vmatprep.subr.mxu0 0.0
        %321 = vmatpush1.msra.mxu0 0.0
        %322 = vmatprep.subr.mxu0 0.0
        %323 = vmatpush1.msra.mxu0 0.0
        %324 = vmatprep.subr.mxu0 0.0
        %325 = vmatpush1.msra.mxu0 0.0
        %326 = vmatprep.subr.mxu0 0.0
        %327 = vmatpush1.msra.mxu0 0.0
        %328 = vmatprep.subr.mxu0 0.0
        %329 = vmatpush1.msra.mxu0 0.0
        %330 = vmatprep.subr.mxu0 0.0
        %331 = vmatpush1.msra.mxu0 0.0
        %332 = vmatprep.subr.mxu0 0.0
        %333 = vmatpush1.msra.mxu0 0.0
        %334 = vmatprep.subr.mxu0 0.0
        %335 = vmatpush1.msra.mxu0 0.0
        %336 = vmatprep.subr.mxu0 0.0
        %337 = vmatpush1.msra.mxu0 0.0
        %338 = vmatprep.subr.mxu0 0.0
        %339 = vmatpush1.msra.mxu0 0.0
        %340 = vmatprep.subr.mxu0 0.0
        %341 = vmatpush1.msra.mxu0 0.0
        %342 = vmatprep.subr.mxu0 0.0
        %343 = vmatpush1.msra.mxu0 0.0
        %344 = vmatprep.subr.mxu0 0.0
        %345 = vmatpush1.msra.mxu0 0.0
        %346 = vmatprep.subr.mxu0 0.0
        %347 = vmatpush1.msra.mxu0 0.0
        %348 = vmatprep.subr.mxu0 0.0
        %349 = vmatpush1.msra.mxu0 0.0
        %350 = vmatprep.subr.mxu0 0.0
        %351 = vmatpush1.msra.mxu0 0.0
        %352 = vmatprep.subr.mxu0 0.0
        %353 = vmatpush1.msra.mxu0 0.0
        %354 = vmatprep.subr.mxu0 0.0
        %355 = vmatpush1.msra.mxu0 0.0
        %356 = vmatprep.subr.mxu0 0.0
        %357 = vmatpush1.msra.mxu0 0.0
        %358 = vmatprep.subr.mxu0 0.0
        %359 = vmatpush1.msra.mxu0 0.0
        %360 = vmatprep.subr.mxu0 0.0
        %361 = vmatpush1.msra.mxu0 0.0
        %362 = vmatprep.subr.mxu0 0.0
        %363 = vmatpush1.msra.mxu0 0.0
        %364 = vmatprep.subr.mxu0 0.0
        %365 = vmatpush1.msra.mxu0 0.0
        %366 = vmatprep.subr.mxu0 0.0
        %367 = vmatpush1.msra.mxu0 0.0
        %368 = vmatprep.subr.mxu0 0.0
        %369 = vmatpush1.msra.mxu0 0.0
        %370 = vmatprep.subr.mxu0 0.0
        %371 = vmatpush1.msra.mxu0 0.0
        %372 = vmatprep.subr.mxu0 0.0
        %373 = vmatpush1.msra.mxu0 0.0
        %374 = vmatprep.subr.mxu0 0.0
        %375 = vmatpush1.msra.mxu0 0.0
        %376 = vmatprep.subr.mxu0 0.0
        %377 = vmatpush1.msra.mxu0 0.0
        %378 = vmatprep.mubr.f32.mxu0 0.0
        %v379 = vand.u32 %v227, 4294901760
        %380 = vmatmul.mubr.f32.gmra.mrb[0].mxu0 %v379
        %v381 = vpop.f32.mrb[0].mxu0
        %v382 = vadd.f32 %v306, %v381
        %v383 = vpop.f32.mrb[0].mxu0
        %384 = vdwg.mxu0
        %385 = vmatprep.subr.mxu0 0.0
        %v386 = vand.u32 %v231, 4294901760
        %v387 = vsub.f32 %v231, %v386
        %388 = vmatpush1.msra.mxu0 %v387
        %389 = vmatprep.subr.mxu0 0.0
        %390 = vmatpush1.msra.mxu0 0.0
        %391 = vmatprep.subr.mxu0 0.0
        %392 = vmatpush1.msra.mxu0 0.0
        %393 = vmatprep.subr.mxu0 0.0
        %394 = vmatpush1.msra.mxu0 0.0
        %395 = vmatprep.subr.mxu0 0.0
        %396 = vmatpush1.msra.mxu0 0.0
        %397 = vmatprep.subr.mxu0 0.0
        %398 = vmatpush1.msra.mxu0 0.0
        %399 = vmatprep.subr.mxu0 0.0
        %400 = vmatpush1.msra.mxu0 0.0
        %401 = vmatprep.subr.mxu0 0.0
        %402 = vmatpush1.msra.mxu0 0.0
        %403 = vmatprep.subr.mxu0 0.0
        %404 = vmatpush1.msra.mxu0 0.0
        %405 = vmatprep.subr.mxu0 0.0
        %406 = vmatpush1.msra.mxu0 0.0
        %407 = vmatprep.subr.mxu0 0.0
        %408 = vmatpush1.msra.mxu0 0.0
        %409 = vmatprep.subr.mxu0 0.0
        %410 = vmatpush1.msra.mxu0 0.0
        %411 = vmatprep.subr.mxu0 0.0
        %412 = vmatpush1.msra.mxu0 0.0
        %413 = vmatprep.subr.mxu0 0.0
        %414 = vmatpush1.msra.mxu0 0.0
        %415 = vmatprep.subr.mxu0 0.0
        %416 = vmatpush1.msra.mxu0 0.0
        %417 = vmatprep.subr.mxu0 0.0
        %418 = vmatpush1.msra.mxu0 0.0
        %419 = vmatprep.subr.mxu0 0.0
        %420 = vmatpush1.msra.mxu0 0.0
        %421 = vmatprep.subr.mxu0 0.0
        %422 = vmatpush1.msra.mxu0 0.0
        %423 = vmatprep.subr.mxu0 0.0
        %424 = vmatpush1.msra.mxu0 0.0
        %425 = vmatprep.subr.mxu0 0.0
        %426 = vmatpush1.msra.mxu0 0.0
        %427 = vmatprep.subr.mxu0 0.0
        %428 = vmatpush1.msra.mxu0 0.0
        %429 = vmatprep.subr.mxu0 0.0
        %430 = vmatpush1.msra.mxu0 0.0
        %431 = vmatprep.subr.mxu0 0.0
        %432 = vmatpush1.msra.mxu0 0.0
        %433 = vmatprep.subr.mxu0 0.0
        %434 = vmatpush1.msra.mxu0 0.0
        %435 = vmatprep.subr.mxu0 0.0
        %436 = vmatpush1.msra.mxu0 0.0
        %437 = vmatprep.subr.mxu0 0.0
        %438 = vmatpush1.msra.mxu0 0.0
        %439 = vmatprep.subr.mxu0 0.0
        %440 = vmatpush1.msra.mxu0 0.0
        %441 = vmatprep.subr.mxu0 0.0
        %442 = vmatpush1.msra.mxu0 0.0
        %443 = vmatprep.subr.mxu0 0.0
        %444 = vmatpush1.msra.mxu0 0.0
        %445 = vmatprep.subr.mxu0 0.0
        %446 = vmatpush1.msra.mxu0 0.0
        %447 = vmatprep.subr.mxu0 0.0
        %448 = vmatpush1.msra.mxu0 0.0
        %449 = vmatprep.subr.mxu0 0.0
        %450 = vmatpush1.msra.mxu0 0.0
        %451 = vmatprep.mubr.f32.mxu0 0.0
        %v452 = vand.u32 %v227, 4294901760
        %v453 = vsub.f32 %v227, %v452
        %454 = vmatmul.mubr.f32.gmra.mrb[0].mxu0 %v453
        %v455 = vpop.f32.mrb[0].mxu0
        %v456 = vadd.f32 %v382, %v455
        %v457 = vpop.f32.mrb[0].mxu0
        %458 = vdwg.mxu0
        %459 = vmatprep.subr.mxu0 0.0
        %v460 = vand.u32 %v231, 4294901760
        %461 = vmatpush1.msra.mxu0 %v460
        %462 = vmatprep.subr.mxu0 0.0
        %463 = vmatpush1.msra.mxu0 0.0
        %464 = vmatprep.subr.mxu0 0.0
        %465 = vmatpush1.msra.mxu0 0.0
        %466 = vmatprep.subr.mxu0 0.0
        %467 = vmatpush1.msra.mxu0 0.0
        %468 = vmatprep.subr.mxu0 0.0
        %469 = vmatpush1.msra.mxu0 0.0
        %470 = vmatprep.subr.mxu0 0.0
        %471 = vmatpush1.msra.mxu0 0.0
        %472 = vmatprep.subr.mxu0 0.0
        %473 = vmatpush1.msra.mxu0 0.0
        %474 = vmatprep.subr.mxu0 0.0
        %475 = vmatpush1.msra.mxu0 0.0
        %476 = vmatprep.subr.mxu0 0.0
        %477 = vmatpush1.msra.mxu0 0.0
        %478 = vmatprep.subr.mxu0 0.0
        %479 = vmatpush1.msra.mxu0 0.0
        %480 = vmatprep.subr.mxu0 0.0
        %481 = vmatpush1.msra.mxu0 0.0
        %482 = vmatprep.subr.mxu0 0.0
        %483 = vmatpush1.msra.mxu0 0.0
        %484 = vmatprep.subr.mxu0 0.0
        %485 = vmatpush1.msra.mxu0 0.0
        %486 = vmatprep.subr.mxu0 0.0
        %487 = vmatpush1.msra.mxu0 0.0
        %488 = vmatprep.subr.mxu0 0.0
        %489 = vmatpush1.msra.mxu0 0.0
        %490 = vmatprep.subr.mxu0 0.0
        %491 = vmatpush1.msra.mxu0 0.0
        %492 = vmatprep.subr.mxu0 0.0
        %493 = vmatpush1.msra.mxu0 0.0
        %494 = vmatprep.subr.mxu0 0.0
        %495 = vmatpush1.msra.mxu0 0.0
        %496 = vmatprep.subr.mxu0 0.0
        %497 = vmatpush1.msra.mxu0 0.0
        %498 = vmatprep.subr.mxu0 0.0
        %499 = vmatpush1.msra.mxu0 0.0
        %500 = vmatprep.subr.mxu0 0.0
        %501 = vmatpush1.msra.mxu0 0.0
        %502 = vmatprep.subr.mxu0 0.0
        %503 = vmatpush1.msra.mxu0 0.0
        %504 = vmatprep.subr.mxu0 0.0
        %505 = vmatpush1.msra.mxu0 0.0
        %506 = vmatprep.subr.mxu0 0.0
        %507 = vmatpush1.msra.mxu0 0.0
        %508 = vmatprep.subr.mxu0 0.0
        %509 = vmatpush1.msra.mxu0 0.0
        %510 = vmatprep.subr.mxu0 0.0
        %511 = vmatpush1.msra.mxu0 0.0
        %512 = vmatprep.subr.mxu0 0.0
        %513 = vmatpush1.msra.mxu0 0.0
        %514 = vmatprep.subr.mxu0 0.0
        %515 = vmatpush1.msra.mxu0 0.0
        %516 = vmatprep.subr.mxu0 0.0
        %517 = vmatpush1.msra.mxu0 0.0
        %518 = vmatprep.subr.mxu0 0.0
        %519 = vmatpush1.msra.mxu0 0.0
        %520 = vmatprep.subr.mxu0 0.0
        %521 = vmatpush1.msra.mxu0 0.0
        %522 = vmatprep.subr.mxu0 0.0
        %523 = vmatpush1.msra.mxu0 0.0
        %524 = vmatprep.mubr.f32.mxu0 0.0
        %v525 = vand.u32 %v227, 4294901760
        %v526 = vsub.f32 %v227, %v525
        %v527 = vand.u32 %v526, 4294901760
        %528 = vmatmul.mubr.f32.gmra.mrb[0].mxu0 %v527
        %v529 = vpop.f32.mrb[0].mxu0
        %v530 = vadd.f32 %v456, %v529
        %v531 = vpop.f32.mrb[0].mxu0
        %532 = vdwg.mxu0
        %533 = vmatprep.subr.mxu0 0.0
        %v534 = vand.u32 %v231, 4294901760
        %v535 = vsub.f32 %v231, %v534
        %v536 = vand.u32 %v535, 4294901760
        %537 = vmatpush1.msra.mxu0 %v536
        %538 = vmatprep.subr.mxu0 0.0
        %539 = vmatpush1.msra.mxu0 0.0
        %540 = vmatprep.subr.mxu0 0.0
        %541 = vmatpush1.msra.mxu0 0.0
        %542 = vmatprep.subr.mxu0 0.0
        %543 = vmatpush1.msra.mxu0 0.0
        %544 = vmatprep.subr.mxu0 0.0
        %545 = vmatpush1.msra.mxu0 0.0
        %546 = vmatprep.subr.mxu0 0.0
        %547 = vmatpush1.msra.mxu0 0.0
        %548 = vmatprep.subr.mxu0 0.0
        %549 = vmatpush1.msra.mxu0 0.0
        %550 = vmatprep.subr.mxu0 0.0
        %551 = vmatpush1.msra.mxu0 0.0
        %552 = vmatprep.subr.mxu0 0.0
        %553 = vmatpush1.msra.mxu0 0.0
        %554 = vmatprep.subr.mxu0 0.0
        %555 = vmatpush1.msra.mxu0 0.0
        %556 = vmatprep.subr.mxu0 0.0
        %557 = vmatpush1.msra.mxu0 0.0
        %558 = vmatprep.subr.mxu0 0.0
        %559 = vmatpush1.msra.mxu0 0.0
        %560 = vmatprep.subr.mxu0 0.0
        %561 = vmatpush1.msra.mxu0 0.0
        %562 = vmatprep.subr.mxu0 0.0
        %563 = vmatpush1.msra.mxu0 0.0
        %564 = vmatprep.subr.mxu0 0.0
        %565 = vmatpush1.msra.mxu0 0.0
        %566 = vmatprep.subr.mxu0 0.0
        %567 = vmatpush1.msra.mxu0 0.0
        %568 = vmatprep.subr.mxu0 0.0
        %569 = vmatpush1.msra.mxu0 0.0
        %570 = vmatprep.subr.mxu0 0.0
        %571 = vmatpush1.msra.mxu0 0.0
        %572 = vmatprep.subr.mxu0 0.0
        %573 = vmatpush1.msra.mxu0 0.0
        %574 = vmatprep.subr.mxu0 0.0
        %575 = vmatpush1.msra.mxu0 0.0
        %576 = vmatprep.subr.mxu0 0.0
        %577 = vmatpush1.msra.mxu0 0.0
        %578 = vmatprep.subr.mxu0 0.0
        %579 = vmatpush1.msra.mxu0 0.0
        %580 = vmatprep.subr.mxu0 0.0
        %581 = vmatpush1.msra.mxu0 0.0
        %582 = vmatprep.subr.mxu0 0.0
        %583 = vmatpush1.msra.mxu0 0.0
        %584 = vmatprep.subr.mxu0 0.0
        %585 = vmatpush1.msra.mxu0 0.0
        %586 = vmatprep.subr.mxu0 0.0
        %587 = vmatpush1.msra.mxu0 0.0
        %588 = vmatprep.subr.mxu0 0.0
        %589 = vmatpush1.msra.mxu0 0.0
        %590 = vmatprep.subr.mxu0 0.0
        %591 = vmatpush1.msra.mxu0 0.0
        %592 = vmatprep.subr.mxu0 0.0
        %593 = vmatpush1.msra.mxu0 0.0
        %594 = vmatprep.subr.mxu0 0.0
        %595 = vmatpush1.msra.mxu0 0.0
        %596 = vmatprep.subr.mxu0 0.0
        %597 = vmatpush1.msra.mxu0 0.0
        %598 = vmatprep.subr.mxu0 0.0
        %599 = vmatpush1.msra.mxu0 0.0
        %600 = vmatprep.mubr.f32.mxu0 0.0
        %v601 = vand.u32 %v227, 4294901760
        %602 = vmatmul.mubr.f32.gmra.mrb[0].mxu0 %v601
        %v603 = vpop.f32.mrb[0].mxu0
        %v604 = vadd.f32 %v530, %v603
        %v605 = vpop.f32.mrb[0].mxu0
        %606 = vdwg.mxu0
        %607 = vmatprep.subr.mxu0 0.0
        %v608 = vand.u32 %v231, 4294901760
        %609 = vmatpush1.msra.mxu0 %v608
        %610 = vmatprep.subr.mxu0 0.0
        %611 = vmatpush1.msra.mxu0 0.0
        %612 = vmatprep.subr.mxu0 0.0
        %613 = vmatpush1.msra.mxu0 0.0
        %614 = vmatprep.subr.mxu0 0.0
        %615 = vmatpush1.msra.mxu0 0.0
        %616 = vmatprep.subr.mxu0 0.0
        %617 = vmatpush1.msra.mxu0 0.0
        %618 = vmatprep.subr.mxu0 0.0
        %619 = vmatpush1.msra.mxu0 0.0
        %620 = vmatprep.subr.mxu0 0.0
        %621 = vmatpush1.msra.mxu0 0.0
        %622 = vmatprep.subr.mxu0 0.0
        %623 = vmatpush1.msra.mxu0 0.0
        %624 = vmatprep.subr.mxu0 0.0
        %625 = vmatpush1.msra.mxu0 0.0
        %626 = vmatprep.subr.mxu0 0.0
        %627 = vmatpush1.msra.mxu0 0.0
        %628 = vmatprep.subr.mxu0 0.0
        %629 = vmatpush1.msra.mxu0 0.0
        %630 = vmatprep.subr.mxu0 0.0
        %631 = vmatpush1.msra.mxu0 0.0
        %632 = vmatprep.subr.mxu0 0.0
        %633 = vmatpush1.msra.mxu0 0.0
        %634 = vmatprep.subr.mxu0 0.0
        %635 = vmatpush1.msra.mxu0 0.0
        %636 = vmatprep.subr.mxu0 0.0
        %637 = vmatpush1.msra.mxu0 0.0
        %638 = vmatprep.subr.mxu0 0.0
        %639 = vmatpush1.msra.mxu0 0.0
        %640 = vmatprep.subr.mxu0 0.0
        %641 = vmatpush1.msra.mxu0 0.0
        %642 = vmatprep.subr.mxu0 0.0
        %643 = vmatpush1.msra.mxu0 0.0
        %644 = vmatprep.subr.mxu0 0.0
        %645 = vmatpush1.msra.mxu0 0.0
        %646 = vmatprep.subr.mxu0 0.0
        %647 = vmatpush1.msra.mxu0 0.0
        %648 = vmatprep.subr.mxu0 0.0
        %649 = vmatpush1.msra.mxu0 0.0
        %650 = vmatprep.subr.mxu0 0.0
        %651 = vmatpush1.msra.mxu0 0.0
        %652 = vmatprep.subr.mxu0 0.0
        %653 = vmatpush1.msra.mxu0 0.0
        %654 = vmatprep.subr.mxu0 0.0
        %655 = vmatpush1.msra.mxu0 0.0
        %656 = vmatprep.subr.mxu0 0.0
        %657 = vmatpush1.msra.mxu0 0.0
        %658 = vmatprep.subr.mxu0 0.0
        %659 = vmatpush1.msra.mxu0 0.0
        %660 = vmatprep.subr.mxu0 0.0
        %661 = vmatpush1.msra.mxu0 0.0
        %662 = vmatprep.subr.mxu0 0.0
        %663 = vmatpush1.msra.mxu0 0.0
        %664 = vmatprep.subr.mxu0 0.0
        %665 = vmatpush1.msra.mxu0 0.0
        %666 = vmatprep.subr.mxu0 0.0
        %667 = vmatpush1.msra.mxu0 0.0
        %668 = vmatprep.subr.mxu0 0.0
        %669 = vmatpush1.msra.mxu0 0.0
        %670 = vmatprep.subr.mxu0 0.0
        %671 = vmatpush1.msra.mxu0 0.0
        %672 = vmatprep.mubr.f32.mxu0 0.0
        %v673 = vand.u32 %v227, 4294901760
        %674 = vmatmul.mubr.f32.gmra.mrb[0].mxu0 %v673
        %v675 = vpop.f32.mrb[0].mxu0
        %v676 = vadd.f32 %v604, %v675
        %v677 = vpop.f32.mrb[0].mxu0
        %678 = vdwg.mxu0
        %v679 = vand.u32 2147483647, %v676
        %vm680 = vcmp.le.f32.partialorder %v679, 0.7853982
        %vm681 = vcmp.lt.s32.totalorder %v676, 0
        %v682 = vand.u32 %v676, 2139095040
        %v683 = vshrl.u32 %v682, 23
        %v684 = vsub.s32 %v683, 127
        %v685 = vand.u32 2147483647, %v676
        %v686 = vand.u32 %v685, 8388607
        %v687 = vor.u32 %v686, 8388608
        %v688 = vsub.s32 0, %v687
        %v689 = vadd.s32 %v684, 1
        %vm690 = vcmp.gt.s32.totalorder %v689, 0
        %v691 = vsel %vm690, %v689, 0
        %v692 = vshrl.u32 %v691, 5
        %v693 = vand.u32 %v691, 31
        %v694 = vsub.s32 32, %v693
        %v695 = vshrl.u32 683565275, %v694
        %v696 = vshll.u32 683565275, %v693
        %v697 = vshrl.u32 2475754826, %v694
        %v698 = vor.u32 %v696, %v697
        %v699 = vshll.u32 2475754826, %v693
        %v700 = vshrl.u32 2131351028, %v694
        %v701 = vor.u32 %v699, %v700
        %v702 = vshll.u32 2131351028, %v693
        %v703 = vshrl.u32 2102212464, %v694
        %v704 = vor.u32 %v702, %v703
        %v705 = vshll.u32 2102212464, %v693
        %v706 = vshrl.u32 920167782, %v694
        %v707 = vor.u32 %v705, %v706
        %v708 = vshll.u32 920167782, %v693
        %v709 = vshrl.u32 1326507024, %v694
        %v710 = vor.u32 %v708, %v709
        %vm711 = vcmp.lt.s32.totalorder %v692, 1
        %vm712 = vcmp.lt.s32.totalorder %v692, 2
        %vm713 = vcmp.lt.s32.totalorder %v692, 3
        %vm714 = vcmp.lt.s32.totalorder %v692, 4
        %v715 = vsel %vm711, %v695, %v698
        %v716 = vsel %vm714, %v704, 2102212464
        %v717 = vsel %vm713, %v701, %v716
        %v718 = vsel %vm712, %v715, %v717
        %v719 = vsel %vm711, %v698, %v701
        %v720 = vsel %vm714, %v707, 920167782
        %v721 = vsel %vm713, %v704, %v720
        %v722 = vsel %vm712, %v719, %v721
        %v723 = vsel %vm711, %v701, %v704
        %v724 = vsel %vm714, %v710, 1326507024
        %v725 = vsel %vm713, %v707, %v724
        %v726 = vsel %vm712, %v723, %v725
        %v727 = vshll.u32 %v687, 8
        %v728 = vmul.u32.u64.compose %v727, %v726
        %v729 = vextract.low.u32 %v728
        %v730 = vextract.high.u32 %v728
        %v731 = vmul.u32.u64.compose %v727, %v722
        %v732 = vextract.low.u32 %v731
        %v733 = vextract.high.u32 %v731
        %v734 = vmul.u32 %v727, %v718
        %v735 = vadd.s32 %v730, %v732
        %vm736 = vc.u32 %v730, %v732
        %v737 = vadd.s32 %v733, 1
        %v738 = vsel %vm736, %v737, %v733
        %v739 = vadd.s32 %v734, %v738
        %v740 = vadd.s32 %v739, 536870912
        %v741 = vshrl.u32 %v740, 30
        %v742 = vshll.u32 %v741, 30
        %v743 = vsub.s32 %v739, %v742
        %vm744 = vcmp.lt.s32.totalorder %v743, 0
        %v745 = vsub.s32 0, %v743
        %v746 = vsel %vm744, %v745, %v743
        %v747 = vclz %v746
        %v748 = vsub.s32 %v747, 2
        %vm749 = vcmp.gt.s32.totalorder 0, %v748
        %v750 = vsel %vm749, 0, %v748
        %v751 = vsub.s32 32, %v750
        %v752 = vshll.u32 %v743, %v750
        %v753 = vshrl.u32 %v735, %v751
        %v754 = vor.u32 %v752, %v753
        %v755 = vsub.s32 4294967266, %v750
        %v756 = vadd.s32 %v755, 127
        %v757 = vshll.u32 %v756, 23
        %v758 = vor.u32 4788187, %v757
        %v759 = vand.u32 2147483647, %v758
        %v761 = vcvt.s32.f32 %v754
        %v762 = vmul.f32 %v761, %v759
        %v763 = vxor.u32 %v762, 2147483648
        %v764 = vsel %vm681, %v763, %v762
        %v765 = vsub.s32 4, %v741
        %v766 = vsel %vm681, %v765, %v741
        %v767 = vsel %vm680, %v676, %v764
        %v768 = vsel %vm680, 0, %v766
        %v769 = vcosq.f32.pop %v767
        %v770 = vsinq.f32.pop %v767
        %vm771 = vweird.f32 %v676
        %v772 = vand.u32 %v768, 3
        %vm773 = vcmp.lt.s32.totalorder %v772, 2
        %vm774 = vcmp.eq.s32.totalorder %v772, 0
        %v775 = vxor.u32 %v770, 2147483648
        %v776 = vsel %vm774, %v769, %v775
        %vm777 = vcmp.eq.s32.totalorder %v772, 2
        %v778 = vxor.u32 %v769, 2147483648
        %v779 = vsel %vm777, %v778, %v770
        %v780 = vsel %vm773, %v776, %v779
        %v781 = vsel %vm771, nan, %v780
        %v782 = vld [vmem:[#allocation2] sm:$0xff]
        %v783 = vld [vmem:[#allocation2 + $0x8] sm:$0xff]
        %v784 = vld [vmem:[#allocation2 + $0x10] sm:$0xff]
        %v785 = vld [vmem:[#allocation2 + $0x18] sm:$0xff]
        %v786 = vand.u32 2147483647, %v676
        %vm787 = vcmp.le.f32.partialorder %v786, 0.7853982
        %vm788 = vcmp.lt.s32.totalorder %v676, 0
        %v789 = vand.u32 %v676, 2139095040
        %v790 = vshrl.u32 %v789, 23
        %v791 = vsub.s32 %v790, 127
        %v792 = vand.u32 2147483647, %v676
        %v793 = vand.u32 %v792, 8388607
        %v794 = vor.u32 %v793, 8388608
        %v795 = vsub.s32 0, %v794
        %v796 = vadd.s32 %v791, 1
        %vm797 = vcmp.gt.s32.totalorder %v796, 0
        %v798 = vsel %vm797, %v796, 0
        %v799 = vshrl.u32 %v798, 5
        %v800 = vand.u32 %v798, 31
        %v801 = vsub.s32 32, %v800
        %v802 = vshrl.u32 683565275, %v801
        %v803 = vshll.u32 683565275, %v800
        %v804 = vshrl.u32 2475754826, %v801
        %v805 = vor.u32 %v803, %v804
        %v806 = vshll.u32 2475754826, %v800
        %v807 = vshrl.u32 2131351028, %v801
        %v808 = vor.u32 %v806, %v807
        %v809 = vshll.u32 2131351028, %v800
        %v810 = vshrl.u32 2102212464, %v801
        %v811 = vor.u32 %v809, %v810
        %v812 = vshll.u32 2102212464, %v800
        %v813 = vshrl.u32 920167782, %v801
        %v814 = vor.u32 %v812, %v813
        %v815 = vshll.u32 920167782, %v800
        %v816 = vshrl.u32 1326507024, %v801
        %v817 = vor.u32 %v815, %v816
        %vm818 = vcmp.lt.s32.totalorder %v799, 1
        %vm819 = vcmp.lt.s32.totalorder %v799, 2
        %vm820 = vcmp.lt.s32.totalorder %v799, 3
        %vm821 = vcmp.lt.s32.totalorder %v799, 4
        %v822 = vsel %vm818, %v802, %v805
        %v823 = vsel %vm821, %v811, 2102212464
        %v824 = vsel %vm820, %v808, %v823
        %v825 = vsel %vm819, %v822, %v824
        %v826 = vsel %vm818, %v805, %v808
        %v827 = vsel %vm821, %v814, 920167782
        %v828 = vsel %vm820, %v811, %v827
        %v829 = vsel %vm819, %v826, %v828
        %v830 = vsel %vm818, %v808, %v811
        %v831 = vsel %vm821, %v817, 1326507024
        %v832 = vsel %vm820, %v814, %v831
        %v833 = vsel %vm819, %v830, %v832
        %v834 = vshll.u32 %v794, 8
        %v835 = vmul.u32.u64.compose %v834, %v833
        %v836 = vextract.low.u32 %v835
        %v837 = vextract.high.u32 %v835
        %v838 = vmul.u32.u64.compose %v834, %v829
        %v839 = vextract.low.u32 %v838
        %v840 = vextract.high.u32 %v838
        %v841 = vmul.u32 %v834, %v825
        %v842 = vadd.s32 %v837, %v839
        %vm843 = vc.u32 %v837, %v839
        %v844 = vadd.s32 %v840, 1
        %v845 = vsel %vm843, %v844, %v840
        %v846 = vadd.s32 %v841, %v845
        %v847 = vadd.s32 %v846, 536870912
        %v848 = vshrl.u32 %v847, 30
        %v849 = vshll.u32 %v848, 30
        %v850 = vsub.s32 %v846, %v849
        %vm851 = vcmp.lt.s32.totalorder %v850, 0
        %v852 = vsub.s32 0, %v850
        %v853 = vsel %vm851, %v852, %v850
        %v854 = vclz %v853
        %v855 = vsub.s32 %v854, 2
        %vm856 = vcmp.gt.s32.totalorder 0, %v855
        %v857 = vsel %vm856, 0, %v855
        %v858 = vsub.s32 32, %v857
        %v859 = vshll.u32 %v850, %v857
        %v860 = vshrl.u32 %v842, %v858
        %v861 = vor.u32 %v859, %v860
        %v862 = vsub.s32 4294967266, %v857
        %v863 = vadd.s32 %v862, 127
        %v864 = vshll.u32 %v863, 23
        %v865 = vor.u32 4788187, %v864
        %v866 = vand.u32 2147483647, %v865
        %v868 = vcvt.s32.f32 %v861
        %v869 = vmul.f32 %v868, %v866
        %v870 = vxor.u32 %v869, 2147483648
        %v871 = vsel %vm788, %v870, %v869
        %v872 = vsub.s32 4, %v848
        %v873 = vsel %vm788, %v872, %v848
        %v874 = vsel %vm787, %v676, %v871
        %v875 = vsel %vm787, 0, %v873
        %v876 = vcosq.f32.pop %v874
        %v877 = vsinq.f32.pop %v874
        %vm878 = vweird.f32 %v676
        %v879 = vadd.s32 %v875, 3
        %v880 = vand.u32 %v879, 3
        %vm881 = vcmp.lt.s32.totalorder %v880, 2
        %vm882 = vcmp.eq.s32.totalorder %v880, 0
        %v883 = vxor.u32 %v877, 2147483648
        %v884 = vsel %vm882, %v876, %v883
        %vm885 = vcmp.eq.s32.totalorder %v880, 2
        %v886 = vxor.u32 %v876, 2147483648
        %v887 = vsel %vm885, %v886, %v877
        %v888 = vsel %vm881, %v884, %v887
        %v889 = vsel %vm878, nan, %v888
        %v890 = vld [vmem:[#allocation5] sm:$0xff]
        %v891 = vld [vmem:[#allocation5 + $0x8] sm:$0xff]
        %v892 = vld [vmem:[#allocation5 + $0x10] sm:$0xff]
        %v893 = vld [vmem:[#allocation5 + $0x18] sm:$0xff]
        %vm894 = vcmask 261120
        %v896 = vsel %vm894, %v889, 0
        %898 = vmatprep.subr.mxu0 0.0
        %v899 = vand.u32 %v890, 4294901760
        %900 = vmatpush1.msra.mxu0 %v899
        %901 = vmatprep.subr.mxu0 0.0
        %v902 = vand.u32 %v891, 4294901760
        %903 = vmatpush1.msra.mxu0 %v902
        %904 = vmatprep.subr.mxu0 0.0
        %v905 = vand.u32 %v892, 4294901760
        %906 = vmatpush1.msra.mxu0 %v905
        %907 = vmatprep.subr.mxu0 0.0
        %v908 = vand.u32 %v893, 4294901760
        %909 = vmatpush1.msra.mxu0 %v908
        %910 = vmatprep.subr.mxu0 0.0
        %911 = vmatpush1.msra.mxu0 0.0
        %912 = vmatprep.subr.mxu0 0.0
        %913 = vmatpush1.msra.mxu0 0.0
        %914 = vmatprep.subr.mxu0 0.0
        %915 = vmatpush1.msra.mxu0 0.0
        %916 = vmatprep.subr.mxu0 0.0
        %917 = vmatpush1.msra.mxu0 0.0
        %918 = vmatprep.subr.mxu0 0.0
        %919 = vmatpush1.msra.mxu0 0.0
        %920 = vmatprep.subr.mxu0 0.0
        %921 = vmatpush1.msra.mxu0 0.0
        %922 = vmatprep.subr.mxu0 0.0
        %923 = vmatpush1.msra.mxu0 0.0
        %924 = vmatprep.subr.mxu0 0.0
        %925 = vmatpush1.msra.mxu0 0.0
        %926 = vmatprep.subr.mxu0 0.0
        %927 = vmatpush1.msra.mxu0 0.0
        %928 = vmatprep.subr.mxu0 0.0
        %929 = vmatpush1.msra.mxu0 0.0
        %930 = vmatprep.subr.mxu0 0.0
        %931 = vmatpush1.msra.mxu0 0.0
        %932 = vmatprep.subr.mxu0 0.0
        %933 = vmatpush1.msra.mxu0 0.0
        %934 = vmatprep.subr.mxu0 0.0
        %935 = vmatpush1.msra.mxu0 0.0
        %936 = vmatprep.subr.mxu0 0.0
        %937 = vmatpush1.msra.mxu0 0.0
        %938 = vmatprep.subr.mxu0 0.0
        %939 = vmatpush1.msra.mxu0 0.0
        %940 = vmatprep.subr.mxu0 0.0
        %941 = vmatpush1.msra.mxu0 0.0
        %942 = vmatprep.subr.mxu0 0.0
        %943 = vmatpush1.msra.mxu0 0.0
        %944 = vmatprep.subr.mxu0 0.0
        %945 = vmatpush1.msra.mxu0 0.0
        %946 = vmatprep.subr.mxu0 0.0
        %947 = vmatpush1.msra.mxu0 0.0
        %948 = vmatprep.subr.mxu0 0.0
        %949 = vmatpush1.msra.mxu0 0.0
        %950 = vmatprep.subr.mxu0 0.0
        %951 = vmatpush1.msra.mxu0 0.0
        %952 = vmatprep.subr.mxu0 0.0
        %953 = vmatpush1.msra.mxu0 0.0
        %954 = vmatprep.subr.mxu0 0.0
        %955 = vmatpush1.msra.mxu0 0.0
        %956 = vmatprep.subr.mxu0 0.0
        %957 = vmatpush1.msra.mxu0 0.0
        %958 = vmatprep.subr.mxu0 0.0
        %959 = vmatpush1.msra.mxu0 0.0
        %960 = vmatprep.subr.mxu0 0.0
        %961 = vmatpush1.msra.mxu0 0.0
        %962 = vmatprep.subr.mxu0 0.0
        %963 = vmatpush1.msra.mxu0 0.0
        %964 = vmatprep.subr.mxu0 0.0
        %965 = vmatpush1.msra.mxu0 0.0
        %966 = vmatprep.mubr.f32.mxu0 0.0
        %v967 = vand.u32 %v896, 4294901760
        %v968 = vsub.f32 %v896, %v967
        %v969 = vand.u32 %v968, 4294901760
        %v970 = vsub.f32 %v968, %v969
        %v971 = vand.u32 %v970, 4294901760
        %972 = vmatmul.mubr.f32.gmra.mrb[0].mxu0 %v971
        %v973 = vpop.f32.mrb[0].mxu0
        %v974 = vadd.f32 0.0, %v973
        %v975 = vpop.f32.mrb[0].mxu0
        %976 = vdwg.mxu0
        %977 = vmatprep.subr.mxu0 0.0
        %v978 = vand.u32 %v890, 4294901760
        %v979 = vsub.f32 %v890, %v978
        %v980 = vand.u32 %v979, 4294901760
        %v981 = vsub.f32 %v979, %v980
        %v982 = vand.u32 %v981, 4294901760
        %983 = vmatpush1.msra.mxu0 %v982
        %984 = vmatprep.subr.mxu0 0.0
        %v985 = vand.u32 %v891, 4294901760
        %v986 = vsub.f32 %v891, %v985
        %v987 = vand.u32 %v986, 4294901760
        %v988 = vsub.f32 %v986, %v987
        %v989 = vand.u32 %v988, 4294901760
        %990 = vmatpush1.msra.mxu0 %v989
        %991 = vmatprep.subr.mxu0 0.0
        %v992 = vand.u32 %v892, 4294901760
        %v993 = vsub.f32 %v892, %v992
        %v994 = vand.u32 %v993, 4294901760
        %v995 = vsub.f32 %v993, %v994
        %v996 = vand.u32 %v995, 4294901760
        %997 = vmatpush1.msra.mxu0 %v996
        %998 = vmatprep.subr.mxu0 0.0
        %v999 = vand.u32 %v893, 4294901760
        %v1000 = vsub.f32 %v893, %v999
        %v1001 = vand.u32 %v1000, 4294901760
        %v1002 = vsub.f32 %v1000, %v1001
        %v1003 = vand.u32 %v1002, 4294901760
        %1004 = vmatpush1.msra.mxu0 %v1003
        %1005 = vmatprep.subr.mxu0 0.0
        %1006 = vmatpush1.msra.mxu0 0.0
        %1007 = vmatprep.subr.mxu0 0.0
        %1008 = vmatpush1.msra.mxu0 0.0
        %1009 = vmatprep.subr.mxu0 0.0
        %1010 = vmatpush1.msra.mxu0 0.0
        %1011 = vmatprep.subr.mxu0 0.0
        %1012 = vmatpush1.msra.mxu0 0.0
        %1013 = vmatprep.subr.mxu0 0.0
        %1014 = vmatpush1.msra.mxu0 0.0
        %1015 = vmatprep.subr.mxu0 0.0
        %1016 = vmatpush1.msra.mxu0 0.0
        %1017 = vmatprep.subr.mxu0 0.0
        %1018 = vmatpush1.msra.mxu0 0.0
        %1019 = vmatprep.subr.mxu0 0.0
        %1020 = vmatpush1.msra.mxu0 0.0
        %1021 = vmatprep.subr.mxu0 0.0
        %1022 = vmatpush1.msra.mxu0 0.0
        %1023 = vmatprep.subr.mxu0 0.0
        %1024 = vmatpush1.msra.mxu0 0.0
        %1025 = vmatprep.subr.mxu0 0.0
        %1026 = vmatpush1.msra.mxu0 0.0
        %1027 = vmatprep.subr.mxu0 0.0
        %1028 = vmatpush1.msra.mxu0 0.0
        %1029 = vmatprep.subr.mxu0 0.0
        %1030 = vmatpush1.msra.mxu0 0.0
        %1031 = vmatprep.subr.mxu0 0.0
        %1032 = vmatpush1.msra.mxu0 0.0
        %1033 = vmatprep.subr.mxu0 0.0
        %1034 = vmatpush1.msra.mxu0 0.0
        %1035 = vmatprep.subr.mxu0 0.0
        %1036 = vmatpush1.msra.mxu0 0.0
        %1037 = vmatprep.subr.mxu0 0.0
        %1038 = vmatpush1.msra.mxu0 0.0
        %1039 = vmatprep.subr.mxu0 0.0
        %1040 = vmatpush1.msra.mxu0 0.0
        %1041 = vmatprep.subr.mxu0 0.0
        %1042 = vmatpush1.msra.mxu0 0.0
        %1043 = vmatprep.subr.mxu0 0.0
        %1044 = vmatpush1.msra.mxu0 0.0
        %1045 = vmatprep.subr.mxu0 0.0
        %1046 = vmatpush1.msra.mxu0 0.0
        %1047 = vmatprep.subr.mxu0 0.0
        %1048 = vmatpush1.msra.mxu0 0.0
        %1049 = vmatprep.subr.mxu0 0.0
        %1050 = vmatpush1.msra.mxu0 0.0
        %1051 = vmatprep.subr.mxu0 0.0
        %1052 = vmatpush1.msra.mxu0 0.0
        %1053 = vmatprep.subr.mxu0 0.0
        %1054 = vmatpush1.msra.mxu0 0.0
        %1055 = vmatprep.subr.mxu0 0.0
        %1056 = vmatpush1.msra.mxu0 0.0
        %1057 = vmatprep.subr.mxu0 0.0
        %1058 = vmatpush1.msra.mxu0 0.0
        %1059 = vmatprep.subr.mxu0 0.0
        %1060 = vmatpush1.msra.mxu0 0.0
        %1061 = vmatprep.mubr.f32.mxu0 0.0
        %v1062 = vand.u32 %v896, 4294901760
        %1063 = vmatmul.mubr.f32.gmra.mrb[0].mxu0 %v1062
        %v1064 = vpop.f32.mrb[0].mxu0
        %v1065 = vadd.f32 %v974, %v1064
        %v1066 = vpop.f32.mrb[0].mxu0
        %1067 = vdwg.mxu0
        %1068 = vmatprep.subr.mxu0 0.0
        %v1069 = vand.u32 %v890, 4294901760
        %v1070 = vsub.f32 %v890, %v1069
        %1071 = vmatpush1.msra.mxu0 %v1070
        %1072 = vmatprep.subr.mxu0 0.0
        %v1073 = vand.u32 %v891, 4294901760
        %v1074 = vsub.f32 %v891, %v1073
        %1075 = vmatpush1.msra.mxu0 %v1074
        %1076 = vmatprep.subr.mxu0 0.0
        %v1077 = vand.u32 %v892, 4294901760
        %v1078 = vsub.f32 %v892, %v1077
        %1079 = vmatpush1.msra.mxu0 %v1078
        %1080 = vmatprep.subr.mxu0 0.0
        %v1081 = vand.u32 %v893, 4294901760
        %v1082 = vsub.f32 %v893, %v1081
        %1083 = vmatpush1.msra.mxu0 %v1082
        %1084 = vmatprep.subr.mxu0 0.0
        %1085 = vmatpush1.msra.mxu0 0.0
        %1086 = vmatprep.subr.mxu0 0.0
        %1087 = vmatpush1.msra.mxu0 0.0
        %1088 = vmatprep.subr.mxu0 0.0
        %1089 = vmatpush1.msra.mxu0 0.0
        %1090 = vmatprep.subr.mxu0 0.0
        %1091 = vmatpush1.msra.mxu0 0.0
        %1092 = vmatprep.subr.mxu0 0.0
        %1093 = vmatpush1.msra.mxu0 0.0
        %1094 = vmatprep.subr.mxu0 0.0
        %1095 = vmatpush1.msra.mxu0 0.0
        %1096 = vmatprep.subr.mxu0 0.0
        %1097 = vmatpush1.msra.mxu0 0.0
        %1098 = vmatprep.subr.mxu0 0.0
        %1099 = vmatpush1.msra.mxu0 0.0
        %1100 = vmatprep.subr.mxu0 0.0
        %1101 = vmatpush1.msra.mxu0 0.0
        %1102 = vmatprep.subr.mxu0 0.0
        %1103 = vmatpush1.msra.mxu0 0.0
        %1104 = vmatprep.subr.mxu0 0.0
        %1105 = vmatpush1.msra.mxu0 0.0
        %1106 = vmatprep.subr.mxu0 0.0
        %1107 = vmatpush1.msra.mxu0 0.0
        %1108 = vmatprep.subr.mxu0 0.0
        %1109 = vmatpush1.msra.mxu0 0.0
        %1110 = vmatprep.subr.mxu0 0.0
        %1111 = vmatpush1.msra.mxu0 0.0
        %1112 = vmatprep.subr.mxu0 0.0
        %1113 = vmatpush1.msra.mxu0 0.0
        %1114 = vmatprep.subr.mxu0 0.0
        %1115 = vmatpush1.msra.mxu0 0.0
        %1116 = vmatprep.subr.mxu0 0.0
        %1117 = vmatpush1.msra.mxu0 0.0
        %1118 = vmatprep.subr.mxu0 0.0
        %1119 = vmatpush1.msra.mxu0 0.0
        %1120 = vmatprep.subr.mxu0 0.0
        %1121 = vmatpush1.msra.mxu0 0.0
        %1122 = vmatprep.subr.mxu0 0.0
        %1123 = vmatpush1.msra.mxu0 0.0
        %1124 = vmatprep.subr.mxu0 0.0
        %1125 = vmatpush1.msra.mxu0 0.0
        %1126 = vmatprep.subr.mxu0 0.0
        %1127 = vmatpush1.msra.mxu0 0.0
        %1128 = vmatprep.subr.mxu0 0.0
        %1129 = vmatpush1.msra.mxu0 0.0
        %1130 = vmatprep.subr.mxu0 0.0
        %1131 = vmatpush1.msra.mxu0 0.0
        %1132 = vmatprep.subr.mxu0 0.0
        %1133 = vmatpush1.msra.mxu0 0.0
        %1134 = vmatprep.subr.mxu0 0.0
        %1135 = vmatpush1.msra.mxu0 0.0
        %1136 = vmatprep.subr.mxu0 0.0
        %1137 = vmatpush1.msra.mxu0 0.0
        %1138 = vmatprep.subr.mxu0 0.0
        %1139 = vmatpush1.msra.mxu0 0.0
        %1140 = vmatprep.mubr.f32.mxu0 0.0
        %v1141 = vand.u32 %v896, 4294901760
        %v1142 = vsub.f32 %v896, %v1141
        %1143 = vmatmul.mubr.f32.gmra.mrb[0].mxu0 %v1142
        %v1144 = vpop.f32.mrb[0].mxu0
        %v1145 = vadd.f32 %v1065, %v1144
        %v1146 = vpop.f32.mrb[0].mxu0
        %1147 = vdwg.mxu0
        %1148 = vmatprep.subr.mxu0 0.0
        %v1149 = vand.u32 %v890, 4294901760
        %1150 = vmatpush1.msra.mxu0 %v1149
        %1151 = vmatprep.subr.mxu0 0.0
        %v1152 = vand.u32 %v891, 4294901760
        %1153 = vmatpush1.msra.mxu0 %v1152
        %1154 = vmatprep.subr.mxu0 0.0
        %v1155 = vand.u32 %v892, 4294901760
        %1156 = vmatpush1.msra.mxu0 %v1155
        %1157 = vmatprep.subr.mxu0 0.0
        %v1158 = vand.u32 %v893, 4294901760
        %1159 = vmatpush1.msra.mxu0 %v1158
        %1160 = vmatprep.subr.mxu0 0.0
        %1161 = vmatpush1.msra.mxu0 0.0
        %1162 = vmatprep.subr.mxu0 0.0
        %1163 = vmatpush1.msra.mxu0 0.0
        %1164 = vmatprep.subr.mxu0 0.0
        %1165 = vmatpush1.msra.mxu0 0.0
        %1166 = vmatprep.subr.mxu0 0.0
        %1167 = vmatpush1.msra.mxu0 0.0
        %1168 = vmatprep.subr.mxu0 0.0
        %1169 = vmatpush1.msra.mxu0 0.0
        %1170 = vmatprep.subr.mxu0 0.0
        %1171 = vmatpush1.msra.mxu0 0.0
        %1172 = vmatprep.subr.mxu0 0.0
        %1173 = vmatpush1.msra.mxu0 0.0
        %1174 = vmatprep.subr.mxu0 0.0
        %1175 = vmatpush1.msra.mxu0 0.0
        %1176 = vmatprep.subr.mxu0 0.0
        %1177 = vmatpush1.msra.mxu0 0.0
        %1178 = vmatprep.subr.mxu0 0.0
        %1179 = vmatpush1.msra.mxu0 0.0
        %1180 = vmatprep.subr.mxu0 0.0
        %1181 = vmatpush1.msra.mxu0 0.0
        %1182 = vmatprep.subr.mxu0 0.0
        %1183 = vmatpush1.msra.mxu0 0.0
        %1184 = vmatprep.subr.mxu0 0.0
        %1185 = vmatpush1.msra.mxu0 0.0
        %1186 = vmatprep.subr.mxu0 0.0
        %1187 = vmatpush1.msra.mxu0 0.0
        %1188 = vmatprep.subr.mxu0 0.0
        %1189 = vmatpush1.msra.mxu0 0.0
        %1190 = vmatprep.subr.mxu0 0.0
        %1191 = vmatpush1.msra.mxu0 0.0
        %1192 = vmatprep.subr.mxu0 0.0
        %1193 = vmatpush1.msra.mxu0 0.0
        %1194 = vmatprep.subr.mxu0 0.0
        %1195 = vmatpush1.msra.mxu0 0.0
        %1196 = vmatprep.subr.mxu0 0.0
        %1197 = vmatpush1.msra.mxu0 0.0
        %1198 = vmatprep.subr.mxu0 0.0
        %1199 = vmatpush1.msra.mxu0 0.0
        %1200 = vmatprep.subr.mxu0 0.0
        %1201 = vmatpush1.msra.mxu0 0.0
        %1202 = vmatprep.subr.mxu0 0.0
        %1203 = vmatpush1.msra.mxu0 0.0
        %1204 = vmatprep.subr.mxu0 0.0
        %1205 = vmatpush1.msra.mxu0 0.0
        %1206 = vmatprep.subr.mxu0 0.0
        %1207 = vmatpush1.msra.mxu0 0.0
        %1208 = vmatprep.subr.mxu0 0.0
        %1209 = vmatpush1.msra.mxu0 0.0
        %1210 = vmatprep.subr.mxu0 0.0
        %1211 = vmatpush1.msra.mxu0 0.0
        %1212 = vmatprep.subr.mxu0 0.0
        %1213 = vmatpush1.msra.mxu0 0.0
        %1214 = vmatprep.subr.mxu0 0.0
        %1215 = vmatpush1.msra.mxu0 0.0
        %1216 = vmatprep.mubr.f32.mxu0 0.0
        %v1217 = vand.u32 %v896, 4294901760
        %v1218 = vsub.f32 %v896, %v1217
        %v1219 = vand.u32 %v1218, 4294901760
        %1220 = vmatmul.mubr.f32.gmra.mrb[0].mxu0 %v1219
        %v1221 = vpop.f32.mrb[0].mxu0
        %v1222 = vadd.f32 %v1145, %v1221
        %v1223 = vpop.f32.mrb[0].mxu0
        %1224 = vdwg.mxu0
        %1225 = vmatprep.subr.mxu0 0.0
        %v1226 = vand.u32 %v890, 4294901760
        %v1227 = vsub.f32 %v890, %v1226
        %v1228 = vand.u32 %v1227, 4294901760
        %1229 = vmatpush1.msra.mxu0 %v1228
        %1230 = vmatprep.subr.mxu0 0.0
        %v1231 = vand.u32 %v891, 4294901760
        %v1232 = vsub.f32 %v891, %v1231
        %v1233 = vand.u32 %v1232, 4294901760
        %1234 = vmatpush1.msra.mxu0 %v1233
        %1235 = vmatprep.subr.mxu0 0.0
        %v1236 = vand.u32 %v892, 4294901760
        %v1237 = vsub.f32 %v892, %v1236
        %v1238 = vand.u32 %v1237, 4294901760
        %1239 = vmatpush1.msra.mxu0 %v1238
        %1240 = vmatprep.subr.mxu0 0.0
        %v1241 = vand.u32 %v893, 4294901760
        %v1242 = vsub.f32 %v893, %v1241
        %v1243 = vand.u32 %v1242, 4294901760
        %1244 = vmatpush1.msra.mxu0 %v1243
        %1245 = vmatprep.subr.mxu0 0.0
        %1246 = vmatpush1.msra.mxu0 0.0
        %1247 = vmatprep.subr.mxu0 0.0
        %1248 = vmatpush1.msra.mxu0 0.0
        %1249 = vmatprep.subr.mxu0 0.0
        %1250 = vmatpush1.msra.mxu0 0.0
        %1251 = vmatprep.subr.mxu0 0.0
        %1252 = vmatpush1.msra.mxu0 0.0
        %1253 = vmatprep.subr.mxu0 0.0
        %1254 = vmatpush1.msra.mxu0 0.0
        %1255 = vmatprep.subr.mxu0 0.0
        %1256 = vmatpush1.msra.mxu0 0.0
        %1257 = vmatprep.subr.mxu0 0.0
        %1258 = vmatpush1.msra.mxu0 0.0
        %1259 = vmatprep.subr.mxu0 0.0
        %1260 = vmatpush1.msra.mxu0 0.0
        %1261 = vmatprep.subr.mxu0 0.0
        %1262 = vmatpush1.msra.mxu0 0.0
        %1263 = vmatprep.subr.mxu0 0.0
        %1264 = vmatpush1.msra.mxu0 0.0
        %1265 = vmatprep.subr.mxu0 0.0
        %1266 = vmatpush1.msra.mxu0 0.0
        %1267 = vmatprep.subr.mxu0 0.0
        %1268 = vmatpush1.msra.mxu0 0.0
        %1269 = vmatprep.subr.mxu0 0.0
        %1270 = vmatpush1.msra.mxu0 0.0
        %1271 = vmatprep.subr.mxu0 0.0
        %1272 = vmatpush1.msra.mxu0 0.0
        %1273 = vmatprep.subr.mxu0 0.0
        %1274 = vmatpush1.msra.mxu0 0.0
        %1275 = vmatprep.subr.mxu0 0.0
        %1276 = vmatpush1.msra.mxu0 0.0
        %1277 = vmatprep.subr.mxu0 0.0
        %1278 = vmatpush1.msra.mxu0 0.0
        %1279 = vmatprep.subr.mxu0 0.0
        %1280 = vmatpush1.msra.mxu0 0.0
        %1281 = vmatprep.subr.mxu0 0.0
        %1282 = vmatpush1.msra.mxu0 0.0
        %1283 = vmatprep.subr.mxu0 0.0
        %1284 = vmatpush1.msra.mxu0 0.0
        %1285 = vmatprep.subr.mxu0 0.0
        %1286 = vmatpush1.msra.mxu0 0.0
        %1287 = vmatprep.subr.mxu0 0.0
        %1288 = vmatpush1.msra.mxu0 0.0
        %1289 = vmatprep.subr.mxu0 0.0
        %1290 = vmatpush1.msra.mxu0 0.0
        %1291 = vmatprep.subr.mxu0 0.0
        %1292 = vmatpush1.msra.mxu0 0.0
        %1293 = vmatprep.subr.mxu0 0.0
        %1294 = vmatpush1.msra.mxu0 0.0
        %1295 = vmatprep.subr.mxu0 0.0
        %1296 = vmatpush1.msra.mxu0 0.0
        %1297 = vmatprep.subr.mxu0 0.0
        %1298 = vmatpush1.msra.mxu0 0.0
        %1299 = vmatprep.subr.mxu0 0.0
        %1300 = vmatpush1.msra.mxu0 0.0
        %1301 = vmatprep.mubr.f32.mxu0 0.0
        %v1302 = vand.u32 %v896, 4294901760
        %1303 = vmatmul.mubr.f32.gmra.mrb[0].mxu0 %v1302
        %v1304 = vpop.f32.mrb[0].mxu0
        %v1305 = vadd.f32 %v1222, %v1304
        %v1306 = vpop.f32.mrb[0].mxu0
        %1307 = vdwg.mxu0
        %1308 = vmatprep.subr.mxu0 0.0
        %v1309 = vand.u32 %v890, 4294901760
        %1310 = vmatpush1.msra.mxu0 %v1309
        %1311 = vmatprep.subr.mxu0 0.0
        %v1312 = vand.u32 %v891, 4294901760
        %1313 = vmatpush1.msra.mxu0 %v1312
        %1314 = vmatprep.subr.mxu0 0.0
        %v1315 = vand.u32 %v892, 4294901760
        %1316 = vmatpush1.msra.mxu0 %v1315
        %1317 = vmatprep.subr.mxu0 0.0
        %v1318 = vand.u32 %v893, 4294901760
        %1319 = vmatpush1.msra.mxu0 %v1318
        %1320 = vmatprep.subr.mxu0 0.0
        %1321 = vmatpush1.msra.mxu0 0.0
        %1322 = vmatprep.subr.mxu0 0.0
        %1323 = vmatpush1.msra.mxu0 0.0
        %1324 = vmatprep.subr.mxu0 0.0
        %1325 = vmatpush1.msra.mxu0 0.0
        %1326 = vmatprep.subr.mxu0 0.0
        %1327 = vmatpush1.msra.mxu0 0.0
        %1328 = vmatprep.subr.mxu0 0.0
        %1329 = vmatpush1.msra.mxu0 0.0
        %1330 = vmatprep.subr.mxu0 0.0
        %1331 = vmatpush1.msra.mxu0 0.0
        %1332 = vmatprep.subr.mxu0 0.0
        %1333 = vmatpush1.msra.mxu0 0.0
        %1334 = vmatprep.subr.mxu0 0.0
        %1335 = vmatpush1.msra.mxu0 0.0
        %1336 = vmatprep.subr.mxu0 0.0
        %1337 = vmatpush1.msra.mxu0 0.0
        %1338 = vmatprep.subr.mxu0 0.0
        %1339 = vmatpush1.msra.mxu0 0.0
        %1340 = vmatprep.subr.mxu0 0.0
        %1341 = vmatpush1.msra.mxu0 0.0
        %1342 = vmatprep.subr.mxu0 0.0
        %1343 = vmatpush1.msra.mxu0 0.0
        %1344 = vmatprep.subr.mxu0 0.0
        %1345 = vmatpush1.msra.mxu0 0.0
        %1346 = vmatprep.subr.mxu0 0.0
        %1347 = vmatpush1.msra.mxu0 0.0
        %1348 = vmatprep.subr.mxu0 0.0
        %1349 = vmatpush1.msra.mxu0 0.0
        %1350 = vmatprep.subr.mxu0 0.0
        %1351 = vmatpush1.msra.mxu0 0.0
        %1352 = vmatprep.subr.mxu0 0.0
        %1353 = vmatpush1.msra.mxu0 0.0
        %1354 = vmatprep.subr.mxu0 0.0
        %1355 = vmatpush1.msra.mxu0 0.0
        %1356 = vmatprep.subr.mxu0 0.0
        %1357 = vmatpush1.msra.mxu0 0.0
        %1358 = vmatprep.subr.mxu0 0.0
        %1359 = vmatpush1.msra.mxu0 0.0
        %1360 = vmatprep.subr.mxu0 0.0
        %1361 = vmatpush1.msra.mxu0 0.0
        %1362 = vmatprep.subr.mxu0 0.0
        %1363 = vmatpush1.msra.mxu0 0.0
        %1364 = vmatprep.subr.mxu0 0.0
        %1365 = vmatpush1.msra.mxu0 0.0
        %1366 = vmatprep.subr.mxu0 0.0
        %1367 = vmatpush1.msra.mxu0 0.0
        %1368 = vmatprep.subr.mxu0 0.0
        %1369 = vmatpush1.msra.mxu0 0.0
        %1370 = vmatprep.subr.mxu0 0.0
        %1371 = vmatpush1.msra.mxu0 0.0
        %1372 = vmatprep.subr.mxu0 0.0
        %1373 = vmatpush1.msra.mxu0 0.0
        %1374 = vmatprep.subr.mxu0 0.0
        %1375 = vmatpush1.msra.mxu0 0.0
        %1376 = vmatprep.mubr.f32.mxu0 0.0
        %v1377 = vand.u32 %v896, 4294901760
        %1378 = vmatmul.mubr.f32.gmra.mrb[0].mxu0 %v1377
        %v1379 = vpop.f32.mrb[0].mxu0
        %v1380 = vadd.f32 %v1305, %v1379
        %v1381 = vpop.f32.mrb[0].mxu0
        %1382 = vdwg.mxu0
        %v1384 = vsel %vm894, %v781, 0
        %1386 = vmatprep.subr.mxu0 0.0
        %v1387 = vand.u32 %v782, 4294901760
        %1388 = vmatpush1.msra.mxu0 %v1387
        %1389 = vmatprep.subr.mxu0 0.0
        %v1390 = vand.u32 %v783, 4294901760
        %1391 = vmatpush1.msra.mxu0 %v1390
        %1392 = vmatprep.subr.mxu0 0.0
        %v1393 = vand.u32 %v784, 4294901760
        %1394 = vmatpush1.msra.mxu0 %v1393
        %1395 = vmatprep.subr.mxu0 0.0
        %v1396 = vand.u32 %v785, 4294901760
        %1397 = vmatpush1.msra.mxu0 %v1396
        %1398 = vmatprep.subr.mxu0 0.0
        %1399 = vmatpush1.msra.mxu0 0.0
        %1400 = vmatprep.subr.mxu0 0.0
        %1401 = vmatpush1.msra.mxu0 0.0
        %1402 = vmatprep.subr.mxu0 0.0
        %1403 = vmatpush1.msra.mxu0 0.0
        %1404 = vmatprep.subr.mxu0 0.0
        %1405 = vmatpush1.msra.mxu0 0.0
        %1406 = vmatprep.subr.mxu0 0.0
        %1407 = vmatpush1.msra.mxu0 0.0
        %1408 = vmatprep.subr.mxu0 0.0
        %1409 = vmatpush1.msra.mxu0 0.0
        %1410 = vmatprep.subr.mxu0 0.0
        %1411 = vmatpush1.msra.mxu0 0.0
        %1412 = vmatprep.subr.mxu0 0.0
        %1413 = vmatpush1.msra.mxu0 0.0
        %1414 = vmatprep.subr.mxu0 0.0
        %1415 = vmatpush1.msra.mxu0 0.0
        %1416 = vmatprep.subr.mxu0 0.0
        %1417 = vmatpush1.msra.mxu0 0.0
        %1418 = vmatprep.subr.mxu0 0.0
        %1419 = vmatpush1.msra.mxu0 0.0
        %1420 = vmatprep.subr.mxu0 0.0
        %1421 = vmatpush1.msra.mxu0 0.0
        %1422 = vmatprep.subr.mxu0 0.0
        %1423 = vmatpush1.msra.mxu0 0.0
        %1424 = vmatprep.subr.mxu0 0.0
        %1425 = vmatpush1.msra.mxu0 0.0
        %1426 = vmatprep.subr.mxu0 0.0
        %1427 = vmatpush1.msra.mxu0 0.0
        %1428 = vmatprep.subr.mxu0 0.0
        %1429 = vmatpush1.msra.mxu0 0.0
        %1430 = vmatprep.subr.mxu0 0.0
        %1431 = vmatpush1.msra.mxu0 0.0
        %1432 = vmatprep.subr.mxu0 0.0
        %1433 = vmatpush1.msra.mxu0 0.0
        %1434 = vmatprep.subr.mxu0 0.0
        %1435 = vmatpush1.msra.mxu0 0.0
        %1436 = vmatprep.subr.mxu0 0.0
        %1437 = vmatpush1.msra.mxu0 0.0
        %1438 = vmatprep.subr.mxu0 0.0
        %1439 = vmatpush1.msra.mxu0 0.0
        %1440 = vmatprep.subr.mxu0 0.0
        %1441 = vmatpush1.msra.mxu0 0.0
        %1442 = vmatprep.subr.mxu0 0.0
        %1443 = vmatpush1.msra.mxu0 0.0
        %1444 = vmatprep.subr.mxu0 0.0
        %1445 = vmatpush1.msra.mxu0 0.0
        %1446 = vmatprep.subr.mxu0 0.0
        %1447 = vmatpush1.msra.mxu0 0.0
        %1448 = vmatprep.subr.mxu0 0.0
        %1449 = vmatpush1.msra.mxu0 0.0
        %1450 = vmatprep.subr.mxu0 0.0
        %1451 = vmatpush1.msra.mxu0 0.0
        %1452 = vmatprep.subr.mxu0 0.0
        %1453 = vmatpush1.msra.mxu0 0.0
        %1454 = vmatprep.mubr.f32.mxu0 0.0
        %v1455 = vand.u32 %v1384, 4294901760
        %v1456 = vsub.f32 %v1384, %v1455
        %v1457 = vand.u32 %v1456, 4294901760
        %v1458 = vsub.f32 %v1456, %v1457
        %v1459 = vand.u32 %v1458, 4294901760
        %1460 = vmatmul.mubr.f32.gmra.mrb[0].mxu0 %v1459
        %v1461 = vpop.f32.mrb[0].mxu0
        %v1462 = vadd.f32 %v1380, %v1461
        %v1463 = vpop.f32.mrb[0].mxu0
        %1464 = vdwg.mxu0
        %1465 = vmatprep.subr.mxu0 0.0
        %v1466 = vand.u32 %v782, 4294901760
        %v1467 = vsub.f32 %v782, %v1466
        %v1468 = vand.u32 %v1467, 4294901760
        %v1469 = vsub.f32 %v1467, %v1468
        %v1470 = vand.u32 %v1469, 4294901760
        %1471 = vmatpush1.msra.mxu0 %v1470
        %1472 = vmatprep.subr.mxu0 0.0
        %v1473 = vand.u32 %v783, 4294901760
        %v1474 = vsub.f32 %v783, %v1473
        %v1475 = vand.u32 %v1474, 4294901760
        %v1476 = vsub.f32 %v1474, %v1475
        %v1477 = vand.u32 %v1476, 4294901760
        %1478 = vmatpush1.msra.mxu0 %v1477
        %1479 = vmatprep.subr.mxu0 0.0
        %v1480 = vand.u32 %v784, 4294901760
        %v1481 = vsub.f32 %v784, %v1480
        %v1482 = vand.u32 %v1481, 4294901760
        %v1483 = vsub.f32 %v1481, %v1482
        %v1484 = vand.u32 %v1483, 4294901760
        %1485 = vmatpush1.msra.mxu0 %v1484
        %1486 = vmatprep.subr.mxu0 0.0
        %v1487 = vand.u32 %v785, 4294901760
        %v1488 = vsub.f32 %v785, %v1487
        %v1489 = vand.u32 %v1488, 4294901760
        %v1490 = vsub.f32 %v1488, %v1489
        %v1491 = vand.u32 %v1490, 4294901760
        %1492 = vmatpush1.msra.mxu0 %v1491
        %1493 = vmatprep.subr.mxu0 0.0
        %1494 = vmatpush1.msra.mxu0 0.0
        %1495 = vmatprep.subr.mxu0 0.0
        %1496 = vmatpush1.msra.mxu0 0.0
        %1497 = vmatprep.subr.mxu0 0.0
        %1498 = vmatpush1.msra.mxu0 0.0
        %1499 = vmatprep.subr.mxu0 0.0
        %1500 = vmatpush1.msra.mxu0 0.0
        %1501 = vmatprep.subr.mxu0 0.0
        %1502 = vmatpush1.msra.mxu0 0.0
        %1503 = vmatprep.subr.mxu0 0.0
        %1504 = vmatpush1.msra.mxu0 0.0
        %1505 = vmatprep.subr.mxu0 0.0
        %1506 = vmatpush1.msra.mxu0 0.0
        %1507 = vmatprep.subr.mxu0 0.0
        %1508 = vmatpush1.msra.mxu0 0.0
        %1509 = vmatprep.subr.mxu0 0.0
        %1510 = vmatpush1.msra.mxu0 0.0
        %1511 = vmatprep.subr.mxu0 0.0
        %1512 = vmatpush1.msra.mxu0 0.0
        %1513 = vmatprep.subr.mxu0 0.0
        %1514 = vmatpush1.msra.mxu0 0.0
        %1515 = vmatprep.subr.mxu0 0.0
        %1516 = vmatpush1.msra.mxu0 0.0
        %1517 = vmatprep.subr.mxu0 0.0
        %1518 = vmatpush1.msra.mxu0 0.0
        %1519 = vmatprep.subr.mxu0 0.0
        %1520 = vmatpush1.msra.mxu0 0.0
        %1521 = vmatprep.subr.mxu0 0.0
        %1522 = vmatpush1.msra.mxu0 0.0
        %1523 = vmatprep.subr.mxu0 0.0
        %1524 = vmatpush1.msra.mxu0 0.0
        %1525 = vmatprep.subr.mxu0 0.0
        %1526 = vmatpush1.msra.mxu0 0.0
        %1527 = vmatprep.subr.mxu0 0.0
        %1528 = vmatpush1.msra.mxu0 0.0
        %1529 = vmatprep.subr.mxu0 0.0
        %1530 = vmatpush1.msra.mxu0 0.0
        %1531 = vmatprep.subr.mxu0 0.0
        %1532 = vmatpush1.msra.mxu0 0.0
        %1533 = vmatprep.subr.mxu0 0.0
        %1534 = vmatpush1.msra.mxu0 0.0
        %1535 = vmatprep.subr.mxu0 0.0
        %1536 = vmatpush1.msra.mxu0 0.0
        %1537 = vmatprep.subr.mxu0 0.0
        %1538 = vmatpush1.msra.mxu0 0.0
        %1539 = vmatprep.subr.mxu0 0.0
        %1540 = vmatpush1.msra.mxu0 0.0
        %1541 = vmatprep.subr.mxu0 0.0
        %1542 = vmatpush1.msra.mxu0 0.0
        %1543 = vmatprep.subr.mxu0 0.0
        %1544 = vmatpush1.msra.mxu0 0.0
        %1545 = vmatprep.subr.mxu0 0.0
        %1546 = vmatpush1.msra.mxu0 0.0
        %1547 = vmatprep.subr.mxu0 0.0
        %1548 = vmatpush1.msra.mxu0 0.0
        %1549 = vmatprep.mubr.f32.mxu0 0.0
        %v1550 = vand.u32 %v1384, 4294901760
        %1551 = vmatmul.mubr.f32.gmra.mrb[0].mxu0 %v1550
        %v1552 = vpop.f32.mrb[0].mxu0
        %v1553 = vadd.f32 %v1462, %v1552
        %v1554 = vpop.f32.mrb[0].mxu0
        %1555 = vdwg.mxu0
        %1556 = vmatprep.subr.mxu0 0.0
        %v1557 = vand.u32 %v782, 4294901760
        %v1558 = vsub.f32 %v782, %v1557
        %1559 = vmatpush1.msra.mxu0 %v1558
        %1560 = vmatprep.subr.mxu0 0.0
        %v1561 = vand.u32 %v783, 4294901760
        %v1562 = vsub.f32 %v783, %v1561
        %1563 = vmatpush1.msra.mxu0 %v1562
        %1564 = vmatprep.subr.mxu0 0.0
        %v1565 = vand.u32 %v784, 4294901760
        %v1566 = vsub.f32 %v784, %v1565
        %1567 = vmatpush1.msra.mxu0 %v1566
        %1568 = vmatprep.subr.mxu0 0.0
        %v1569 = vand.u32 %v785, 4294901760
        %v1570 = vsub.f32 %v785, %v1569
        %1571 = vmatpush1.msra.mxu0 %v1570
        %1572 = vmatprep.subr.mxu0 0.0
        %1573 = vmatpush1.msra.mxu0 0.0
        %1574 = vmatprep.subr.mxu0 0.0
        %1575 = vmatpush1.msra.mxu0 0.0
        %1576 = vmatprep.subr.mxu0 0.0
        %1577 = vmatpush1.msra.mxu0 0.0
        %1578 = vmatprep.subr.mxu0 0.0
        %1579 = vmatpush1.msra.mxu0 0.0
        %1580 = vmatprep.subr.mxu0 0.0
        %1581 = vmatpush1.msra.mxu0 0.0
        %1582 = vmatprep.subr.mxu0 0.0
        %1583 = vmatpush1.msra.mxu0 0.0
        %1584 = vmatprep.subr.mxu0 0.0
        %1585 = vmatpush1.msra.mxu0 0.0
        %1586 = vmatprep.subr.mxu0 0.0
        %1587 = vmatpush1.msra.mxu0 0.0
        %1588 = vmatprep.subr.mxu0 0.0
        %1589 = vmatpush1.msra.mxu0 0.0
        %1590 = vmatprep.subr.mxu0 0.0
        %1591 = vmatpush1.msra.mxu0 0.0
        %1592 = vmatprep.subr.mxu0 0.0
        %1593 = vmatpush1.msra.mxu0 0.0
        %1594 = vmatprep.subr.mxu0 0.0
        %1595 = vmatpush1.msra.mxu0 0.0
        %1596 = vmatprep.subr.mxu0 0.0
        %1597 = vmatpush1.msra.mxu0 0.0
        %1598 = vmatprep.subr.mxu0 0.0
        %1599 = vmatpush1.msra.mxu0 0.0
        %1600 = vmatprep.subr.mxu0 0.0
        %1601 = vmatpush1.msra.mxu0 0.0
        %1602 = vmatprep.subr.mxu0 0.0
        %1603 = vmatpush1.msra.mxu0 0.0
        %1604 = vmatprep.subr.mxu0 0.0
        %1605 = vmatpush1.msra.mxu0 0.0
        %1606 = vmatprep.subr.mxu0 0.0
        %1607 = vmatpush1.msra.mxu0 0.0
        %1608 = vmatprep.subr.mxu0 0.0
        %1609 = vmatpush1.msra.mxu0 0.0
        %1610 = vmatprep.subr.mxu0 0.0
        %1611 = vmatpush1.msra.mxu0 0.0
        %1612 = vmatprep.subr.mxu0 0.0
        %1613 = vmatpush1.msra.mxu0 0.0
        %1614 = vmatprep.subr.mxu0 0.0
        %1615 = vmatpush1.msra.mxu0 0.0
        %1616 = vmatprep.subr.mxu0 0.0
        %1617 = vmatpush1.msra.mxu0 0.0
        %1618 = vmatprep.subr.mxu0 0.0
        %1619 = vmatpush1.msra.mxu0 0.0
        %1620 = vmatprep.subr.mxu0 0.0
        %1621 = vmatpush1.msra.mxu0 0.0
        %1622 = vmatprep.subr.mxu0 0.0
        %1623 = vmatpush1.msra.mxu0 0.0
        %1624 = vmatprep.subr.mxu0 0.0
        %1625 = vmatpush1.msra.mxu0 0.0
        %1626 = vmatprep.subr.mxu0 0.0
        %1627 = vmatpush1.msra.mxu0 0.0
        %1628 = vmatprep.mubr.f32.mxu0 0.0
        %v1629 = vand.u32 %v1384, 4294901760
        %v1630 = vsub.f32 %v1384, %v1629
        %1631 = vmatmul.mubr.f32.gmra.mrb[0].mxu0 %v1630
        %v1632 = vpop.f32.mrb[0].mxu0
        %v1633 = vadd.f32 %v1553, %v1632
        %v1634 = vpop.f32.mrb[0].mxu0
        %1635 = vdwg.mxu0
        %1636 = vmatprep.subr.mxu0 0.0
        %v1637 = vand.u32 %v782, 4294901760
        %1638 = vmatpush1.msra.mxu0 %v1637
        %1639 = vmatprep.subr.mxu0 0.0
        %v1640 = vand.u32 %v783, 4294901760
        %1641 = vmatpush1.msra.mxu0 %v1640
        %1642 = vmatprep.subr.mxu0 0.0
        %v1643 = vand.u32 %v784, 4294901760
        %1644 = vmatpush1.msra.mxu0 %v1643
        %1645 = vmatprep.subr.mxu0 0.0
        %v1646 = vand.u32 %v785, 4294901760
        %1647 = vmatpush1.msra.mxu0 %v1646
        %1648 = vmatprep.subr.mxu0 0.0
        %1649 = vmatpush1.msra.mxu0 0.0
        %1650 = vmatprep.subr.mxu0 0.0
        %1651 = vmatpush1.msra.mxu0 0.0
        %1652 = vmatprep.subr.mxu0 0.0
        %1653 = vmatpush1.msra.mxu0 0.0
        %1654 = vmatprep.subr.mxu0 0.0
        %1655 = vmatpush1.msra.mxu0 0.0
        %1656 = vmatprep.subr.mxu0 0.0
        %1657 = vmatpush1.msra.mxu0 0.0
        %1658 = vmatprep.subr.mxu0 0.0
        %1659 = vmatpush1.msra.mxu0 0.0
        %1660 = vmatprep.subr.mxu0 0.0
        %1661 = vmatpush1.msra.mxu0 0.0
        %1662 = vmatprep.subr.mxu0 0.0
        %1663 = vmatpush1.msra.mxu0 0.0
        %1664 = vmatprep.subr.mxu0 0.0
        %1665 = vmatpush1.msra.mxu0 0.0
        %1666 = vmatprep.subr.mxu0 0.0
        %1667 = vmatpush1.msra.mxu0 0.0
        %1668 = vmatprep.subr.mxu0 0.0
        %1669 = vmatpush1.msra.mxu0 0.0
        %1670 = vmatprep.subr.mxu0 0.0
        %1671 = vmatpush1.msra.mxu0 0.0
        %1672 = vmatprep.subr.mxu0 0.0
        %1673 = vmatpush1.msra.mxu0 0.0
        %1674 = vmatprep.subr.mxu0 0.0
        %1675 = vmatpush1.msra.mxu0 0.0
        %1676 = vmatprep.subr.mxu0 0.0
        %1677 = vmatpush1.msra.mxu0 0.0
        %1678 = vmatprep.subr.mxu0 0.0
        %1679 = vmatpush1.msra.mxu0 0.0
        %1680 = vmatprep.subr.mxu0 0.0
        %1681 = vmatpush1.msra.mxu0 0.0
        %1682 = vmatprep.subr.mxu0 0.0
        %1683 = vmatpush1.msra.mxu0 0.0
        %1684 = vmatprep.subr.mxu0 0.0
        %1685 = vmatpush1.msra.mxu0 0.0
        %1686 = vmatprep.subr.mxu0 0.0
        %1687 = vmatpush1.msra.mxu0 0.0
        %1688 = vmatprep.subr.mxu0 0.0
        %1689 = vmatpush1.msra.mxu0 0.0
        %1690 = vmatprep.subr.mxu0 0.0
        %1691 = vmatpush1.msra.mxu0 0.0
        %1692 = vmatprep.subr.mxu0 0.0
        %1693 = vmatpush1.msra.mxu0 0.0
        %1694 = vmatprep.subr.mxu0 0.0
        %1695 = vmatpush1.msra.mxu0 0.0
        %1696 = vmatprep.subr.mxu0 0.0
        %1697 = vmatpush1.msra.mxu0 0.0
        %1698 = vmatprep.subr.mxu0 0.0
        %1699 = vmatpush1.msra.mxu0 0.0
        %1700 = vmatprep.subr.mxu0 0.0
        %1701 = vmatpush1.msra.mxu0 0.0
        %1702 = vmatprep.subr.mxu0 0.0
        %1703 = vmatpush1.msra.mxu0 0.0
        %1704 = vmatprep.mubr.f32.mxu0 0.0
        %v1705 = vand.u32 %v1384, 4294901760
        %v1706 = vsub.f32 %v1384, %v1705
        %v1707 = vand.u32 %v1706, 4294901760
        %1708 = vmatmul.mubr.f32.gmra.mrb[0].mxu0 %v1707
        %v1709 = vpop.f32.mrb[0].mxu0
        %v1710 = vadd.f32 %v1633, %v1709
        %v1711 = vpop.f32.mrb[0].mxu0
        %1712 = vdwg.mxu0
        %1713 = vmatprep.subr.mxu0 0.0
        %v1714 = vand.u32 %v782, 4294901760
        %v1715 = vsub.f32 %v782, %v1714
        %v1716 = vand.u32 %v1715, 4294901760
        %1717 = vmatpush1.msra.mxu0 %v1716
        %1718 = vmatprep.subr.mxu0 0.0
        %v1719 = vand.u32 %v783, 4294901760
        %v1720 = vsub.f32 %v783, %v1719
        %v1721 = vand.u32 %v1720, 4294901760
        %1722 = vmatpush1.msra.mxu0 %v1721
        %1723 = vmatprep.subr.mxu0 0.0
        %v1724 = vand.u32 %v784, 4294901760
        %v1725 = vsub.f32 %v784, %v1724
        %v1726 = vand.u32 %v1725, 4294901760
        %1727 = vmatpush1.msra.mxu0 %v1726
        %1728 = vmatprep.subr.mxu0 0.0
        %v1729 = vand.u32 %v785, 4294901760
        %v1730 = vsub.f32 %v785, %v1729
        %v1731 = vand.u32 %v1730, 4294901760
        %1732 = vmatpush1.msra.mxu0 %v1731
        %1733 = vmatprep.subr.mxu0 0.0
        %1734 = vmatpush1.msra.mxu0 0.0
        %1735 = vmatprep.subr.mxu0 0.0
        %1736 = vmatpush1.msra.mxu0 0.0
        %1737 = vmatprep.subr.mxu0 0.0
        %1738 = vmatpush1.msra.mxu0 0.0
        %1739 = vmatprep.subr.mxu0 0.0
        %1740 = vmatpush1.msra.mxu0 0.0
        %1741 = vmatprep.subr.mxu0 0.0
        %1742 = vmatpush1.msra.mxu0 0.0
        %1743 = vmatprep.subr.mxu0 0.0
        %1744 = vmatpush1.msra.mxu0 0.0
        %1745 = vmatprep.subr.mxu0 0.0
        %1746 = vmatpush1.msra.mxu0 0.0
        %1747 = vmatprep.subr.mxu0 0.0
        %1748 = vmatpush1.msra.mxu0 0.0
        %1749 = vmatprep.subr.mxu0 0.0
        %1750 = vmatpush1.msra.mxu0 0.0
        %1751 = vmatprep.subr.mxu0 0.0
        %1752 = vmatpush1.msra.mxu0 0.0
        %1753 = vmatprep.subr.mxu0 0.0
        %1754 = vmatpush1.msra.mxu0 0.0
        %1755 = vmatprep.subr.mxu0 0.0
        %1756 = vmatpush1.msra.mxu0 0.0
        %1757 = vmatprep.subr.mxu0 0.0
        %1758 = vmatpush1.msra.mxu0 0.0
        %1759 = vmatprep.subr.mxu0 0.0
        %1760 = vmatpush1.msra.mxu0 0.0
        %1761 = vmatprep.subr.mxu0 0.0
        %1762 = vmatpush1.msra.mxu0 0.0
        %1763 = vmatprep.subr.mxu0 0.0
        %1764 = vmatpush1.msra.mxu0 0.0
        %1765 = vmatprep.subr.mxu0 0.0
        %1766 = vmatpush1.msra.mxu0 0.0
        %1767 = vmatprep.subr.mxu0 0.0
        %1768 = vmatpush1.msra.mxu0 0.0
        %1769 = vmatprep.subr.mxu0 0.0
        %1770 = vmatpush1.msra.mxu0 0.0
        %1771 = vmatprep.subr.mxu0 0.0
        %1772 = vmatpush1.msra.mxu0 0.0
        %1773 = vmatprep.subr.mxu0 0.0
        %1774 = vmatpush1.msra.mxu0 0.0
        %1775 = vmatprep.subr.mxu0 0.0
        %1776 = vmatpush1.msra.mxu0 0.0
        %1777 = vmatprep.subr.mxu0 0.0
        %1778 = vmatpush1.msra.mxu0 0.0
        %1779 = vmatprep.subr.mxu0 0.0
        %1780 = vmatpush1.msra.mxu0 0.0
        %1781 = vmatprep.subr.mxu0 0.0
        %1782 = vmatpush1.msra.mxu0 0.0
        %1783 = vmatprep.subr.mxu0 0.0
        %1784 = vmatpush1.msra.mxu0 0.0
        %1785 = vmatprep.subr.mxu0 0.0
        %1786 = vmatpush1.msra.mxu0 0.0
        %1787 = vmatprep.subr.mxu0 0.0
        %1788 = vmatpush1.msra.mxu0 0.0
        %1789 = vmatprep.mubr.f32.mxu0 0.0
        %v1790 = vand.u32 %v1384, 4294901760
        %1791 = vmatmul.mubr.f32.gmra.mrb[0].mxu0 %v1790
        %v1792 = vpop.f32.mrb[0].mxu0
        %v1793 = vadd.f32 %v1710, %v1792
        %v1794 = vpop.f32.mrb[0].mxu0
        %1795 = vdwg.mxu0
        %1796 = vmatprep.subr.mxu0 0.0
        %v1797 = vand.u32 %v782, 4294901760
        %1798 = vmatpush1.msra.mxu0 %v1797
        %1799 = vmatprep.subr.mxu0 0.0
        %v1800 = vand.u32 %v783, 4294901760
        %1801 = vmatpush1.msra.mxu0 %v1800
        %1802 = vmatprep.subr.mxu0 0.0
        %v1803 = vand.u32 %v784, 4294901760
        %1804 = vmatpush1.msra.mxu0 %v1803
        %1805 = vmatprep.subr.mxu0 0.0
        %v1806 = vand.u32 %v785, 4294901760
        %1807 = vmatpush1.msra.mxu0 %v1806
        %1808 = vmatprep.subr.mxu0 0.0
        %1809 = vmatpush1.msra.mxu0 0.0
        %1810 = vmatprep.subr.mxu0 0.0
        %1811 = vmatpush1.msra.mxu0 0.0
        %1812 = vmatprep.subr.mxu0 0.0
        %1813 = vmatpush1.msra.mxu0 0.0
        %1814 = vmatprep.subr.mxu0 0.0
        %1815 = vmatpush1.msra.mxu0 0.0
        %1816 = vmatprep.subr.mxu0 0.0
        %1817 = vmatpush1.msra.mxu0 0.0
        %1818 = vmatprep.subr.mxu0 0.0
        %1819 = vmatpush1.msra.mxu0 0.0
        %1820 = vmatprep.subr.mxu0 0.0
        %1821 = vmatpush1.msra.mxu0 0.0
        %1822 = vmatprep.subr.mxu0 0.0
        %1823 = vmatpush1.msra.mxu0 0.0
        %1824 = vmatprep.subr.mxu0 0.0
        %1825 = vmatpush1.msra.mxu0 0.0
        %1826 = vmatprep.subr.mxu0 0.0
        %1827 = vmatpush1.msra.mxu0 0.0
        %1828 = vmatprep.subr.mxu0 0.0
        %1829 = vmatpush1.msra.mxu0 0.0
        %1830 = vmatprep.subr.mxu0 0.0
        %1831 = vmatpush1.msra.mxu0 0.0
        %1832 = vmatprep.subr.mxu0 0.0
        %1833 = vmatpush1.msra.mxu0 0.0
        %1834 = vmatprep.subr.mxu0 0.0
        %1835 = vmatpush1.msra.mxu0 0.0
        %1836 = vmatprep.subr.mxu0 0.0
        %1837 = vmatpush1.msra.mxu0 0.0
        %1838 = vmatprep.subr.mxu0 0.0
        %1839 = vmatpush1.msra.mxu0 0.0
        %1840 = vmatprep.subr.mxu0 0.0
        %1841 = vmatpush1.msra.mxu0 0.0
        %1842 = vmatprep.subr.mxu0 0.0
        %1843 = vmatpush1.msra.mxu0 0.0
        %1844 = vmatprep.subr.mxu0 0.0
        %1845 = vmatpush1.msra.mxu0 0.0
        %1846 = vmatprep.subr.mxu0 0.0
        %1847 = vmatpush1.msra.mxu0 0.0
        %1848 = vmatprep.subr.mxu0 0.0
        %1849 = vmatpush1.msra.mxu0 0.0
        %1850 = vmatprep.subr.mxu0 0.0
        %1851 = vmatpush1.msra.mxu0 0.0
        %1852 = vmatprep.subr.mxu0 0.0
        %1853 = vmatpush1.msra.mxu0 0.0
        %1854 = vmatprep.subr.mxu0 0.0
        %1855 = vmatpush1.msra.mxu0 0.0
        %1856 = vmatprep.subr.mxu0 0.0
        %1857 = vmatpush1.msra.mxu0 0.0
        %1858 = vmatprep.subr.mxu0 0.0
        %1859 = vmatpush1.msra.mxu0 0.0
        %1860 = vmatprep.subr.mxu0 0.0
        %1861 = vmatpush1.msra.mxu0 0.0
        %1862 = vmatprep.subr.mxu0 0.0
        %1863 = vmatpush1.msra.mxu0 0.0
        %1864 = vmatprep.mubr.f32.mxu0 0.0
        %v1865 = vand.u32 %v1384, 4294901760
        %1866 = vmatmul.mubr.f32.gmra.mrb[0].mxu0 %v1865
        %v1867 = vpop.f32.mrb[0].mxu0
        %v1868 = vadd.f32 %v1793, %v1867
        %v1869 = vpop.f32.mrb[0].mxu0
        %1870 = vdwg.mxu0
        %vm1871 = vcmask 556032
        %1872 = vst.msk [vmem:[%s218] sm:$0xff] %vm1871, %v1868
        %1873 = vst.msk [vmem:[%s218] sm:$0xff] %vm225, %v223
        %s1874 = sand.u32 %s117, 1
        %s1875 = scalar_lea.sflag [#allocation4], %s1874
        %s1876 = sand.u32 %s117, 1
        %s1877 = smul.addr %s1876, 8
        %s1878 = scalar_lea.vmem [#allocation7], %s1877
        // Predicated region
        $region45: #{tpu_custom_call.1} parent=35 // pred_check
          %p1879 = pneg %p127
        $region46: #{tpu_custom_call.1} parent=35 // pred_check_branch
          %1881 = sbr.rel (%p1879) target = $region48
        $region47: #{tpu_custom_call.1} parent=35 // pred_region
          %s1883 = ssub.s32 128, 128
          %1884 = vsyncadd %s1875, %s1883
          %s1885 = smul.addr %s20, 128
          %s1886 = scalar_lea.hbm %s4, %s1885
          %s1888 = sshll.u32 %s1878, 4
          %s1889 = int_to_ptr.vmem [resolvable:$true] %s1888
          %1891 = dma.vmem_to_hbm [thread:$0]  %s1889, 128, %s1886, %s1875
        $region48: #{tpu_custom_call.1} parent=35 // pred_fallthru
          _
      $region36: #{tpu_custom_call.1} parent=5 // pred_fallthru
        _
      %p1892 = scmp.le.s32.totalorder 2, %s15
      // Predicated region
      $region49: #{tpu_custom_call.1} parent=5 // pred_check
        %p1893 = pneg %p1892
      $region50: #{tpu_custom_call.1} parent=5 // pred_check_branch
        %1895 = sbr.rel (%p1893) target = $region52
      $region51: #{tpu_custom_call.1} parent=5 // pred_region
        %s1896 = ssub.s32 %s15, 2
        // Predicated region
        $region53: #{tpu_custom_call.1} parent=51 // pred_check
          %p1897 = pneg %p133
        $region54: #{tpu_custom_call.1} parent=51 // pred_check_branch
          %1899 = sbr.rel (%p1897) target = $region56
        $region55: #{tpu_custom_call.1} parent=51 // pred_region
          %s1900 = sand.u32 %s118, 1
          %s1901 = scalar_lea.sflag [#allocation4], %s1900
          %s1902 = sand.u32 %s118, 1
          %s1903 = smul.addr %s1902, 8
          %s1904 = scalar_lea.vmem [#allocation7], %s1903
          %1905 = dma.done %s1901, 128
        $region56: #{tpu_custom_call.1} parent=51 // pred_fallthru
          _
      $region52: #{tpu_custom_call.1} parent=5 // pred_fallthru
        _
    $region6: #{tpu_custom_call.1} parent=1 // loop_footer
      %s19 = sadd.s32 1, %s15
    $region7: #{tpu_custom_call.1} parent=1 // loop_footer_branch
      %14 = sbr.rel target = $region3
    $region8: #{tpu_custom_call.1} parent=1 // loop_exit
      _
    %1906 = vsyncpa [#allocation3], 1
    %s1907 = scalar_lea.sflag [#allocation3], 1
    %1908 = vsyncpa %s1907, 1
    %1909 = vsyncpa [#allocation6], 1
    %1910 = vsyncpa [#allocation4], 1
    %s1911 = scalar_lea.sflag [#allocation4], 1
    %1912 = vsyncpa %s1911, 1

</llo_original>
